<compile_context>
chip_gen: v7x
topology: tpu7x:2x2x1
jax: 0.10.0
libtpu: 0.0.40
codegen_flags: <defaults>
</compile_context>

<pallas_src>
import functools

import jax
import jax.numpy as jnp
from jax.experimental import pallas as pl
from jax.experimental.pallas import tpu as pltpu

_LANE = 128


def prepare_bilinear_weight(weight, bias, lane=_LANE):
    """One-time parameter transform (parameter setup, not per-step work).

    weight : (O, 2I, 2H)   nn.Bilinear layout
    bias   : (O,)
    returns:
      w_flat : (2H, 2I*Opad) with w_flat[j, i*Opad + o] = weight[o, i, j]
               (lanes o >= O zero-padded so every O-block is 128-lane aligned)
      b_pad  : (1, Opad)     bias zero-padded to Opad lanes
    """
    out_f, two_i, two_h = weight.shape
    o_pad = ((out_f + lane - 1) // lane) * lane
    w_t = jnp.transpose(weight, (2, 1, 0))                     # (2H, 2I, O)
    w_t = jnp.pad(w_t, ((0, 0), (0, 0), (0, o_pad - out_f)))   # (2H, 2I, Opad)
    w_flat = w_t.reshape(two_h, two_i * o_pad)                 # (2H, 2I*Opad)
    b_pad = jnp.pad(bias, (0, o_pad - out_f)).reshape(1, o_pad)
    # TODO(synk): cast w_flat to bf16 here (keep f32 accumulation in the kernel)
    # if model accuracy allows — halves MXU passes and W's VMEM/DMA footprint.
    return w_flat, b_pad


def _bilinear_tanh_kernel(x_ref, h_ref, w_ref, b_ref, o_ref, *, o_pad):
    """tanh(bilinear(x, h) + bias), fully on-chip.

    One MXU contraction over the whole hidden state:
      hw[b, i*Opad + o] = sum_j h[b, j] * w_flat[j, i*Opad + o]
    then 2I lane-aligned full-vreg VPU FMAs over i, then tanh (EUP).
    """
    two_i = x_ref.shape[1]
    out_f = o_ref.shape[1]
    batch = o_ref.shape[0]

    hw = jnp.dot(h_ref[...], w_ref[...],
                 preferred_element_type=jnp.float32,
                 precision=jax.lax.Precision.HIGHEST)          # (B, 2I*Opad) f32

    x = x_ref[...].astype(jnp.float32)                         # (B, 2I)

    # Accumulator = bias broadcast once (sublane broadcast, no zeros+add).
    acc = jnp.broadcast_to(b_ref[...].astype(jnp.float32), (batch, o_pad))

    # Every hw slice starts at a multiple of Opad (>=128): lane-aligned, no XLU
    # rotates. The only cross-lane work left is the 2I single-column x broadcasts.
    for i in range(two_i):                                     # static unroll
        acc = acc + x[:, i:i + 1] * hw[:, i * o_pad:(i + 1) * o_pad]

    o_ref[...] = jnp.tanh(acc[:, :out_f]).astype(o_ref.dtype)


def md_tensorized_rnn_cell(input_h, input_v, w_flat, bias_pad, hx_h=None, hx_v=None):
    """JAX wrapper mirroring MDTensorizedRNNCell.forward.

    input_h, input_v : (B, input_size)
    w_flat, bias_pad : outputs of prepare_bilinear_weight
    hx_h, hx_v       : (B, hidden_size) or None (-> zeros)
    returns          : (B, hidden_size)
    """
    batch, input_size = input_h.shape
    two_h = w_flat.shape[0]
    hidden_size = two_h // 2
    o_pad = w_flat.shape[1] // (2 * input_size)
    dtype = input_h.dtype

    if hx_h is None and hx_v is None:
        # Static zero-state skip: bilinear term is identically zero.
        out0 = jnp.tanh(bias_pad[0, :hidden_size]).astype(dtype)
        return jnp.broadcast_to(out0, (batch, hidden_size))
    if hx_h is None:
        hx_h = jnp.zeros((batch, hidden_size), dtype=dtype)
    if hx_v is None:
        hx_v = jnp.zeros((batch, hidden_size), dtype=dtype)

    x = jnp.concatenate([input_h, input_v], axis=1)            # (B, 2I)
    h = jnp.concatenate([hx_h, hx_v], axis=1)                  # (B, 2H)

    vmem = pltpu.MemorySpace.VMEM
    return pl.pallas_call(
        functools.partial(_bilinear_tanh_kernel, o_pad=o_pad),
        out_shape=jax.ShapeDtypeStruct((batch, hidden_size), dtype),
        in_specs=[
            pl.BlockSpec(memory_space=vmem),   # x       (B, 2I)
            pl.BlockSpec(memory_space=vmem),   # h       (B, 2H)
            pl.BlockSpec(memory_space=vmem),   # w_flat  (2H, 2I*Opad)
            pl.BlockSpec(memory_space=vmem),   # bias    (1, Opad)
        ],
        out_specs=pl.BlockSpec(memory_space=vmem),
    )(x, h, w_flat, bias_pad)


def _reference(input_h, input_v, weight, bias, hx_h, hx_v):
    x = jnp.concatenate([input_h, input_v], axis=1)
    h = jnp.concatenate([hx_h, hx_v], axis=1)
    out = jnp.einsum('bi,oij,bj->bo', x, weight, h,
                     precision=jax.lax.Precision.HIGHEST) + bias[None, :]
    return jnp.tanh(out)


if __name__ == "__main__":
    input_size = 4
    hidden_size = 32
    batch = 2
    dtype = jnp.float32

    key = jax.random.PRNGKey(0)
    k_ih, k_iv, k_hh, k_hv, k_w, k_b = jax.random.split(key, 6)

    input_h = jax.random.normal(k_ih, (batch, input_size), dtype=dtype)
    input_v = jax.random.normal(k_iv, (batch, input_size), dtype=dtype)
    hx_h = jax.random.normal(k_hh, (batch, hidden_size), dtype=dtype)
    hx_v = jax.random.normal(k_hv, (batch, hidden_size), dtype=dtype)

    # nn.Bilinear-shaped parameters, uniform(-1/sqrt(in1), 1/sqrt(in1)) like torch.
    bound = 1.0 / jnp.sqrt(jnp.asarray(2 * input_size, dtype))
    weight = jax.random.uniform(
        k_w, (hidden_size, 2 * input_size, 2 * hidden_size),
        minval=-bound, maxval=bound, dtype=dtype)
    bias = jax.random.uniform(
        k_b, (hidden_size,), minval=-bound, maxval=bound, dtype=dtype)

    # One-time weight preparation (parameter setup, not per-step work).
    w_flat, bias_pad = jax.block_until_ready(prepare_bilinear_weight(weight, bias))

    out = jax.block_until_ready(
        md_tensorized_rnn_cell(input_h, input_v, w_flat, bias_pad, hx_h, hx_v))

    ref = _reference(input_h, input_v, weight, bias, hx_h, hx_v)
    assert out.shape == (batch, hidden_size)
    assert jnp.allclose(out, ref, atol=1e-4, rtol=1e-4), "mismatch vs JAX reference"

    # hx=None (zero-state) path: handled by the static skip, no kernel launch.
    out0 = jax.block_until_ready(
        md_tensorized_rnn_cell(input_h, input_v, w_flat, bias_pad))
    ref0 = _reference(input_h, input_v, weight, bias,
                      jnp.zeros_like(hx_h), jnp.zeros_like(hx_v))
    assert out0.shape == (batch, hidden_size)
    assert jnp.allclose(out0, ref0, atol=1e-4, rtol=1e-4), "mismatch (zero hx) vs reference"

    print("KERNEL_OK")
</pallas_src>

<mosaic_0001>
module attributes {stable_mosaic.version = 11 : i64} {
  func.func @_bilinear_tanh_kernel(%arg0: memref<2x8xf32, #tpu.memory_space<vmem>>, %arg1: memref<2x64xf32, #tpu.memory_space<vmem>>, %arg2: memref<64x1024xf32, #tpu.memory_space<vmem>>, %arg3: memref<1x128xf32, #tpu.memory_space<vmem>>, %arg4: memref<2x32xf32, #tpu.memory_space<vmem>>) attributes {dimension_semantics = [], scalar_prefetch = 0 : i64, scratch_operands = 0 : i64, tpu.core_type = #tpu.core_type<tc>} {
    %c0 = arith.constant 0 : index
    %c0_0 = arith.constant 0 : index
    %0 = vector.load %arg1[%c0, %c0_0] : memref<2x64xf32, #tpu.memory_space<vmem>>, vector<2x64xf32>
    %c0_1 = arith.constant 0 : index
    %c0_2 = arith.constant 0 : index
    %1 = vector.load %arg2[%c0_1, %c0_2] : memref<64x1024xf32, #tpu.memory_space<vmem>>, vector<64x1024xf32>
    %cst = arith.constant dense<0.000000e+00> : vector<2x1024xf32>
    %2 = tpu.matmul %0, %1, %cst {dimension_numbers = #tpu.dot_dimension_numbers<[1], [0], [0], [1], [0, 0, 1, 1], [], []>, precision = #tpu.contract_precision<fp32>} : vector<2x64xf32>, vector<64x1024xf32>, vector<2x1024xf32> -> vector<2x1024xf32>
    %c0_3 = arith.constant 0 : index
    %c0_4 = arith.constant 0 : index
    %3 = vector.load %arg0[%c0_3, %c0_4] : memref<2x8xf32, #tpu.memory_space<vmem>>, vector<2x8xf32>
    %c0_5 = arith.constant 0 : index
    %c0_6 = arith.constant 0 : index
    %4 = vector.load %arg3[%c0_5, %c0_6] : memref<1x128xf32, #tpu.memory_space<vmem>>, vector<1x128xf32>
    %5 = vector.shape_cast %4 : vector<1x128xf32> to vector<1x128xf32>
    %6 = vector.broadcast %5 : vector<1x128xf32> to vector<2x128xf32>
    %7 = vector.extract_strided_slice %3 {offsets = [0, 0], sizes = [2, 1], strides = [1, 1]} : vector<2x8xf32> to vector<2x1xf32>
    %8 = vector.extract_strided_slice %2 {offsets = [0, 0], sizes = [2, 128], strides = [1, 1]} : vector<2x1024xf32> to vector<2x128xf32>
    %9 = vector.broadcast %7 : vector<2x1xf32> to vector<2x128xf32>
    %10 = arith.mulf %9, %8 : vector<2x128xf32>
    %11 = arith.addf %6, %10 : vector<2x128xf32>
    %12 = vector.extract_strided_slice %3 {offsets = [0, 1], sizes = [2, 1], strides = [1, 1]} : vector<2x8xf32> to vector<2x1xf32>
    %13 = vector.extract_strided_slice %2 {offsets = [0, 128], sizes = [2, 128], strides = [1, 1]} : vector<2x1024xf32> to vector<2x128xf32>
    %14 = vector.broadcast %12 : vector<2x1xf32> to vector<2x128xf32>
    %15 = arith.mulf %14, %13 : vector<2x128xf32>
    %16 = arith.addf %11, %15 : vector<2x128xf32>
    %17 = vector.extract_strided_slice %3 {offsets = [0, 2], sizes = [2, 1], strides = [1, 1]} : vector<2x8xf32> to vector<2x1xf32>
    %18 = vector.extract_strided_slice %2 {offsets = [0, 256], sizes = [2, 128], strides = [1, 1]} : vector<2x1024xf32> to vector<2x128xf32>
    %19 = vector.broadcast %17 : vector<2x1xf32> to vector<2x128xf32>
    %20 = arith.mulf %19, %18 : vector<2x128xf32>
    %21 = arith.addf %16, %20 : vector<2x128xf32>
    %22 = vector.extract_strided_slice %3 {offsets = [0, 3], sizes = [2, 1], strides = [1, 1]} : vector<2x8xf32> to vector<2x1xf32>
    %23 = vector.extract_strided_slice %2 {offsets = [0, 384], sizes = [2, 128], strides = [1, 1]} : vector<2x1024xf32> to vector<2x128xf32>
    %24 = vector.broadcast %22 : vector<2x1xf32> to vector<2x128xf32>
    %25 = arith.mulf %24, %23 : vector<2x128xf32>
    %26 = arith.addf %21, %25 : vector<2x128xf32>
    %27 = vector.extract_strided_slice %3 {offsets = [0, 4], sizes = [2, 1], strides = [1, 1]} : vector<2x8xf32> to vector<2x1xf32>
    %28 = vector.extract_strided_slice %2 {offsets = [0, 512], sizes = [2, 128], strides = [1, 1]} : vector<2x1024xf32> to vector<2x128xf32>
    %29 = vector.broadcast %27 : vector<2x1xf32> to vector<2x128xf32>
    %30 = arith.mulf %29, %28 : vector<2x128xf32>
    %31 = arith.addf %26, %30 : vector<2x128xf32>
    %32 = vector.extract_strided_slice %3 {offsets = [0, 5], sizes = [2, 1], strides = [1, 1]} : vector<2x8xf32> to vector<2x1xf32>
    %33 = vector.extract_strided_slice %2 {offsets = [0, 640], sizes = [2, 128], strides = [1, 1]} : vector<2x1024xf32> to vector<2x128xf32>
    %34 = vector.broadcast %32 : vector<2x1xf32> to vector<2x128xf32>
    %35 = arith.mulf %34, %33 : vector<2x128xf32>
    %36 = arith.addf %31, %35 : vector<2x128xf32>
    %37 = vector.extract_strided_slice %3 {offsets = [0, 6], sizes = [2, 1], strides = [1, 1]} : vector<2x8xf32> to vector<2x1xf32>
    %38 = vector.extract_strided_slice %2 {offsets = [0, 768], sizes = [2, 128], strides = [1, 1]} : vector<2x1024xf32> to vector<2x128xf32>
    %39 = vector.broadcast %37 : vector<2x1xf32> to vector<2x128xf32>
    %40 = arith.mulf %39, %38 : vector<2x128xf32>
    %41 = arith.addf %36, %40 : vector<2x128xf32>
    %42 = vector.extract_strided_slice %3 {offsets = [0, 7], sizes = [2, 1], strides = [1, 1]} : vector<2x8xf32> to vector<2x1xf32>
    %43 = vector.extract_strided_slice %2 {offsets = [0, 896], sizes = [2, 128], strides = [1, 1]} : vector<2x1024xf32> to vector<2x128xf32>
    %44 = vector.broadcast %42 : vector<2x1xf32> to vector<2x128xf32>
    %45 = arith.mulf %44, %43 : vector<2x128xf32>
    %46 = arith.addf %41, %45 : vector<2x128xf32>
    %47 = vector.extract_strided_slice %46 {offsets = [0, 0], sizes = [2, 32], strides = [1, 1]} : vector<2x128xf32> to vector<2x32xf32>
    %48 = math.tanh %47 : vector<2x32xf32>
    %c0_7 = arith.constant 0 : index
    %c0_8 = arith.constant 0 : index
    %49 = vector.load %arg4[%c0_7, %c0_8] : memref<2x32xf32, #tpu.memory_space<vmem>>, vector<2x32xf32>
    tpu.vector_store %arg4[%c0_7, %c0_8], %48 {strides = array<i32>} : memref<2x32xf32, #tpu.memory_space<vmem>>, vector<2x32xf32>,
    return
  }
}

</mosaic_0001>

<llo_original>
// kernel: tpu_custom_call.1
$region0: #{tpu_custom_call.1}
  #allocation0 [shape = 'u32[]', space=smem, size = 0x4, offset = 0x4, fixed_abs, tag = 'smem constant byte address 0x4 - core index']
  #allocation1 [shape = 'u32[144,128]{1,0:T(1,128)}', space=vmem, size = 0x12000, scoped, tag = 'internal scratch']
  %s0 = inlined_call_operand.hbm [shape: f32[2,8], index: 0, kind: input, shape index: {}]
  %s1 = inlined_call_operand.vmem [shape: f32[2,64], index: 1, kind: input, shape index: {}]
  %s2 = inlined_call_operand.hbm [shape: f32[64,1024], index: 2, kind: input, shape index: {}]
  %s3 = inlined_call_operand.vmem [shape: f32[1,128], index: 3, kind: input, shape index: {}]
  %s4 = inlined_call_operand.hbm [shape: f32[2,32], index: 4, kind: output, shape index: {}]
  %s5 = sld [smem:[#allocation0]]
  $region34: #{tpu_custom_call.1} parent=0
    _
  %s7 = ssub.s32 1, %s5
  %s8 = scalar_select 0, %s7, %s5
  $region1: #{tpu_custom_call.1} parent=0
    #allocation2 [shape = 'u8[1024]{0}', space=vmem, size = 0x400, scoped, tag = 'input window, operand 0, single buffered']
    #allocation3 [shape = 's32[1]{0}', space=sflag, size = 0x4, scoped, tag = 'scoped memory for tpu_custom_call.1']
    #allocation4 [shape = 's32[1]{0}', space=sflag, size = 0x4, scoped, tag = 'scoped memory for tpu_custom_call.1']
    #allocation5 [shape = 'u8[262144]{0}', space=vmem, size = 0x40000, scoped, tag = 'input window, operand 2, single buffered']
    #allocation6 [shape = 's32[1]{0}', space=sflag, size = 0x4, scoped, tag = 'scoped memory for tpu_custom_call.1']
    #allocation7 [shape = 'u8[1024]{0}', space=vmem, size = 0x400, scoped, tag = 'output window, operand 0, single buffered']
    %9 = vsyncpa [#allocation3], 0
    %10 = vsyncpa [#allocation6], 0
    %11 = vsyncpa [#allocation4], 0
    // Predicated region
    $region2: #{tpu_custom_call.1} parent=1 // pred_check
      _
    $region3: #{tpu_custom_call.1} parent=1 // pred_check_branch
      %13 = sbr.rel (0) target = $region5
    $region4: #{tpu_custom_call.1} parent=1 // pred_region
      %s15 = ssub.s32 32, 32
      %16 = vsyncadd [#allocation3], %s15
      %s18 = sshll.u32 [#allocation2], 4
      %s19 = int_to_ptr.vmem [resolvable:$true] %s18
      %21 = dma.hbm_to_vmem [thread:$0]  %s0, 32, %s19, [#allocation3]
    $region5: #{tpu_custom_call.1} parent=1 // pred_fallthru
      _
    // Predicated region
    $region6: #{tpu_custom_call.1} parent=1 // pred_check
      _
    $region7: #{tpu_custom_call.1} parent=1 // pred_check_branch
      %23 = sbr.rel (0) target = $region9
    $region8: #{tpu_custom_call.1} parent=1 // pred_region
      _
    $region9: #{tpu_custom_call.1} parent=1 // pred_fallthru
      _
    // Predicated region
    $region10: #{tpu_custom_call.1} parent=1 // pred_check
      _
    $region11: #{tpu_custom_call.1} parent=1 // pred_check_branch
      %25 = sbr.rel (0) target = $region13
    $region12: #{tpu_custom_call.1} parent=1 // pred_region
      %s27 = ssub.s32 8192, 8192
      %28 = vsyncadd [#allocation6], %s27
      %s29 = sshll.u32 [#allocation5], 4
      %s30 = int_to_ptr.vmem [resolvable:$true] %s29
      %35 = dma.hbm_to_vmem [thread:$0]  %s2, 8192, %s30, [#allocation6], 1024, 1024, 64
    $region13: #{tpu_custom_call.1} parent=1 // pred_fallthru
      _
    // Predicated region
    $region14: #{tpu_custom_call.1} parent=1 // pred_check
      _
    $region15: #{tpu_custom_call.1} parent=1 // pred_check_branch
      %37 = sbr.rel (0) target = $region17
    $region16: #{tpu_custom_call.1} parent=1 // pred_region
      _
    $region17: #{tpu_custom_call.1} parent=1 // pred_fallthru
      _
    // Predicated region
    $region18: #{tpu_custom_call.1} parent=1 // pred_check
      _
    $region19: #{tpu_custom_call.1} parent=1 // pred_check_branch
      %39 = sbr.rel (0) target = $region21
    $region20: #{tpu_custom_call.1} parent=1 // pred_region
      %40 = dma.done [#allocation3], 32
    $region21: #{tpu_custom_call.1} parent=1 // pred_fallthru
      _
    // Predicated region
    $region22: #{tpu_custom_call.1} parent=1 // pred_check
      _
    $region23: #{tpu_custom_call.1} parent=1 // pred_check_branch
      %42 = sbr.rel (0) target = $region25
    $region24: #{tpu_custom_call.1} parent=1 // pred_region
      %43 = dma.done [#allocation6], 8192
    $region25: #{tpu_custom_call.1} parent=1 // pred_fallthru
      _
    %v44 = vld [vmem:[%s1] sm:$0x3]
    %v45 = vld [vmem:[#allocation5] sm:$0xff]
    %v46 = vld [vmem:[#allocation5 + $0x8] sm:$0xff]
    %v47 = vld [vmem:[#allocation5 + $0x10] sm:$0xff]
    %v48 = vld [vmem:[#allocation5 + $0x18] sm:$0xff]
    %v49 = vld [vmem:[#allocation5 + $0x20] sm:$0xff]
    %v50 = vld [vmem:[#allocation5 + $0x28] sm:$0xff]
    %v51 = vld [vmem:[#allocation5 + $0x30] sm:$0xff]
    %v52 = vld [vmem:[#allocation5 + $0x38] sm:$0xff]
    %v53 = vld [vmem:[#allocation5 + $0x40] sm:$0xff]
    %v54 = vld [vmem:[#allocation5 + $0x48] sm:$0xff]
    %v55 = vld [vmem:[#allocation5 + $0x50] sm:$0xff]
    %v56 = vld [vmem:[#allocation5 + $0x58] sm:$0xff]
    %v57 = vld [vmem:[#allocation5 + $0x60] sm:$0xff]
    %v58 = vld [vmem:[#allocation5 + $0x68] sm:$0xff]
    %v59 = vld [vmem:[#allocation5 + $0x70] sm:$0xff]
    %v60 = vld [vmem:[#allocation5 + $0x78] sm:$0xff]
    %v61 = vld [vmem:[#allocation5 + $0x80] sm:$0xff]
    %v62 = vld [vmem:[#allocation5 + $0x88] sm:$0xff]
    %v63 = vld [vmem:[#allocation5 + $0x90] sm:$0xff]
    %v64 = vld [vmem:[#allocation5 + $0x98] sm:$0xff]
    %v65 = vld [vmem:[#allocation5 + $0xa0] sm:$0xff]
    %v66 = vld [vmem:[#allocation5 + $0xa8] sm:$0xff]
    %v67 = vld [vmem:[#allocation5 + $0xb0] sm:$0xff]
    %v68 = vld [vmem:[#allocation5 + $0xb8] sm:$0xff]
    %v69 = vld [vmem:[#allocation5 + $0xc0] sm:$0xff]
    %v70 = vld [vmem:[#allocation5 + $0xc8] sm:$0xff]
    %v71 = vld [vmem:[#allocation5 + $0xd0] sm:$0xff]
    %v72 = vld [vmem:[#allocation5 + $0xd8] sm:$0xff]
    %v73 = vld [vmem:[#allocation5 + $0xe0] sm:$0xff]
    %v74 = vld [vmem:[#allocation5 + $0xe8] sm:$0xff]
    %v75 = vld [vmem:[#allocation5 + $0xf0] sm:$0xff]
    %v76 = vld [vmem:[#allocation5 + $0xf8] sm:$0xff]
    %v77 = vld [vmem:[#allocation5 + $0x100] sm:$0xff]
    %v78 = vld [vmem:[#allocation5 + $0x108] sm:$0xff]
    %v79 = vld [vmem:[#allocation5 + $0x110] sm:$0xff]
    %v80 = vld [vmem:[#allocation5 + $0x118] sm:$0xff]
    %v81 = vld [vmem:[#allocation5 + $0x120] sm:$0xff]
    %v82 = vld [vmem:[#allocation5 + $0x128] sm:$0xff]
    %v83 = vld [vmem:[#allocation5 + $0x130] sm:$0xff]
    %v84 = vld [vmem:[#allocation5 + $0x138] sm:$0xff]
    %v85 = vld [vmem:[#allocation5 + $0x140] sm:$0xff]
    %v86 = vld [vmem:[#allocation5 + $0x148] sm:$0xff]
    %v87 = vld [vmem:[#allocation5 + $0x150] sm:$0xff]
    %v88 = vld [vmem:[#allocation5 + $0x158] sm:$0xff]
    %v89 = vld [vmem:[#allocation5 + $0x160] sm:$0xff]
    %v90 = vld [vmem:[#allocation5 + $0x168] sm:$0xff]
    %v91 = vld [vmem:[#allocation5 + $0x170] sm:$0xff]
    %v92 = vld [vmem:[#allocation5 + $0x178] sm:$0xff]
    %v93 = vld [vmem:[#allocation5 + $0x180] sm:$0xff]
    %v94 = vld [vmem:[#allocation5 + $0x188] sm:$0xff]
    %v95 = vld [vmem:[#allocation5 + $0x190] sm:$0xff]
    %v96 = vld [vmem:[#allocation5 + $0x198] sm:$0xff]
    %v97 = vld [vmem:[#allocation5 + $0x1a0] sm:$0xff]
    %v98 = vld [vmem:[#allocation5 + $0x1a8] sm:$0xff]
    %v99 = vld [vmem:[#allocation5 + $0x1b0] sm:$0xff]
    %v100 = vld [vmem:[#allocation5 + $0x1b8] sm:$0xff]
    %v101 = vld [vmem:[#allocation5 + $0x1c0] sm:$0xff]
    %v102 = vld [vmem:[#allocation5 + $0x1c8] sm:$0xff]
    %v103 = vld [vmem:[#allocation5 + $0x1d0] sm:$0xff]
    %v104 = vld [vmem:[#allocation5 + $0x1d8] sm:$0xff]
    %v105 = vld [vmem:[#allocation5 + $0x1e0] sm:$0xff]
    %v106 = vld [vmem:[#allocation5 + $0x1e8] sm:$0xff]
    %v107 = vld [vmem:[#allocation5 + $0x1f0] sm:$0xff]
    %v108 = vld [vmem:[#allocation5 + $0x1f8] sm:$0xff]
    %vm109 = vcmask 523264
    %v111 = vsel %vm109, %v44, 0
    %v113 = vand.u32 %v46, 4294901760
    %114 = vmatprep.subr.mxu0 %v113
    %v115 = vand.u32 %v45, 4294901760
    %116 = vmatpush1.msra.mxu0 %v115
    %v117 = vand.u32 %v54, 4294901760
    %118 = vmatprep.subr.mxu0 %v117
    %v119 = vand.u32 %v53, 4294901760
    %120 = vmatpush1.msra.mxu0 %v119
    %v121 = vand.u32 %v62, 4294901760
    %122 = vmatprep.subr.mxu0 %v121
    %v123 = vand.u32 %v61, 4294901760
    %124 = vmatpush1.msra.mxu0 %v123
    %v125 = vand.u32 %v70, 4294901760
    %126 = vmatprep.subr.mxu0 %v125
    %v127 = vand.u32 %v69, 4294901760
    %128 = vmatpush1.msra.mxu0 %v127
    %v129 = vand.u32 %v78, 4294901760
    %130 = vmatprep.subr.mxu0 %v129
    %v131 = vand.u32 %v77, 4294901760
    %132 = vmatpush1.msra.mxu0 %v131
    %v133 = vand.u32 %v86, 4294901760
    %134 = vmatprep.subr.mxu0 %v133
    %v135 = vand.u32 %v85, 4294901760
    %136 = vmatpush1.msra.mxu0 %v135
    %v137 = vand.u32 %v94, 4294901760
    %138 = vmatprep.subr.mxu0 %v137
    %v139 = vand.u32 %v93, 4294901760
    %140 = vmatpush1.msra.mxu0 %v139
    %v141 = vand.u32 %v102, 4294901760
    %142 = vmatprep.subr.mxu0 %v141
    %v143 = vand.u32 %v101, 4294901760
    %144 = vmatpush1.msra.mxu0 %v143
    %145 = vmatprep.subr.mxu0 0.0
    %146 = vmatpush1.msra.mxu0 0.0
    %147 = vmatprep.subr.mxu0 0.0
    %148 = vmatpush1.msra.mxu0 0.0
    %149 = vmatprep.subr.mxu0 0.0
    %150 = vmatpush1.msra.mxu0 0.0
    %151 = vmatprep.subr.mxu0 0.0
    %152 = vmatpush1.msra.mxu0 0.0
    %153 = vmatprep.subr.mxu0 0.0
    %154 = vmatpush1.msra.mxu0 0.0
    %155 = vmatprep.subr.mxu0 0.0
    %156 = vmatpush1.msra.mxu0 0.0
    %157 = vmatprep.subr.mxu0 0.0
    %158 = vmatpush1.msra.mxu0 0.0
    %159 = vmatprep.subr.mxu0 0.0
    %160 = vmatpush1.msra.mxu0 0.0
    %161 = vmatprep.subr.mxu0 0.0
    %162 = vmatpush1.msra.mxu0 0.0
    %163 = vmatprep.subr.mxu0 0.0
    %164 = vmatpush1.msra.mxu0 0.0
    %165 = vmatprep.subr.mxu0 0.0
    %166 = vmatpush1.msra.mxu0 0.0
    %167 = vmatprep.subr.mxu0 0.0
    %168 = vmatpush1.msra.mxu0 0.0
    %169 = vmatprep.subr.mxu0 0.0
    %170 = vmatpush1.msra.mxu0 0.0
    %171 = vmatprep.subr.mxu0 0.0
    %172 = vmatpush1.msra.mxu0 0.0
    %173 = vmatprep.subr.mxu0 0.0
    %174 = vmatpush1.msra.mxu0 0.0
    %175 = vmatprep.subr.mxu0 0.0
    %176 = vmatpush1.msra.mxu0 0.0
    %177 = vmatprep.subr.mxu0 0.0
    %178 = vmatpush1.msra.mxu0 0.0
    %179 = vmatprep.subr.mxu0 0.0
    %180 = vmatpush1.msra.mxu0 0.0
    %181 = vmatprep.subr.mxu0 0.0
    %182 = vmatpush1.msra.mxu0 0.0
    %183 = vmatprep.subr.mxu0 0.0
    %184 = vmatpush1.msra.mxu0 0.0
    %185 = vmatprep.subr.mxu0 0.0
    %186 = vmatpush1.msra.mxu0 0.0
    %187 = vmatprep.subr.mxu0 0.0
    %188 = vmatpush1.msra.mxu0 0.0
    %189 = vmatprep.subr.mxu0 0.0
    %190 = vmatpush1.msra.mxu0 0.0
    %191 = vmatprep.subr.mxu0 0.0
    %192 = vmatpush1.msra.mxu0 0.0
    %193 = vmatprep.mubr.f32.mxu0 0.0
    %v194 = vand.u32 %v111, 4294901760
    %v195 = vsub.f32 %v111, %v194
    %v196 = vand.u32 %v195, 4294901760
    %v197 = vsub.f32 %v195, %v196
    %v198 = vand.u32 %v197, 4294901760
    %199 = vmatmul.mubr.f32.gmra.mrb[0].mxu0 %v198
    %v200 = vpop.f32.mrb[0].mxu0
    %v201 = vadd.f32 0.0, %v200
    %v202 = vpop.f32.mrb[0].mxu0
    %v203 = vadd.f32 0.0, %v202
    %204 = vdwg.mxu0
    %v205 = vand.u32 %v46, 4294901760
    %v206 = vsub.f32 %v46, %v205
    %v207 = vand.u32 %v206, 4294901760
    %v208 = vsub.f32 %v206, %v207
    %v209 = vand.u32 %v208, 4294901760
    %210 = vmatprep.subr.mxu0 %v209
    %v211 = vand.u32 %v45, 4294901760
    %v212 = vsub.f32 %v45, %v211
    %v213 = vand.u32 %v212, 4294901760
    %v214 = vsub.f32 %v212, %v213
    %v215 = vand.u32 %v214, 4294901760
    %216 = vmatpush1.msra.mxu0 %v215
    %v217 = vand.u32 %v54, 4294901760
    %v218 = vsub.f32 %v54, %v217
    %v219 = vand.u32 %v218, 4294901760
    %v220 = vsub.f32 %v218, %v219
    %v221 = vand.u32 %v220, 4294901760
    %222 = vmatprep.subr.mxu0 %v221
    %v223 = vand.u32 %v53, 4294901760
    %v224 = vsub.f32 %v53, %v223
    %v225 = vand.u32 %v224, 4294901760
    %v226 = vsub.f32 %v224, %v225
    %v227 = vand.u32 %v226, 4294901760
    %228 = vmatpush1.msra.mxu0 %v227
    %v229 = vand.u32 %v62, 4294901760
    %v230 = vsub.f32 %v62, %v229
    %v231 = vand.u32 %v230, 4294901760
    %v232 = vsub.f32 %v230, %v231
    %v233 = vand.u32 %v232, 4294901760
    %234 = vmatprep.subr.mxu0 %v233
    %v235 = vand.u32 %v61, 4294901760
    %v236 = vsub.f32 %v61, %v235
    %v237 = vand.u32 %v236, 4294901760
    %v238 = vsub.f32 %v236, %v237
    %v239 = vand.u32 %v238, 4294901760
    %240 = vmatpush1.msra.mxu0 %v239
    %v241 = vand.u32 %v70, 4294901760
    %v242 = vsub.f32 %v70, %v241
    %v243 = vand.u32 %v242, 4294901760
    %v244 = vsub.f32 %v242, %v243
    %v245 = vand.u32 %v244, 4294901760
    %246 = vmatprep.subr.mxu0 %v245
    %v247 = vand.u32 %v69, 4294901760
    %v248 = vsub.f32 %v69, %v247
    %v249 = vand.u32 %v248, 4294901760
    %v250 = vsub.f32 %v248, %v249
    %v251 = vand.u32 %v250, 4294901760
    %252 = vmatpush1.msra.mxu0 %v251
    %v253 = vand.u32 %v78, 4294901760
    %v254 = vsub.f32 %v78, %v253
    %v255 = vand.u32 %v254, 4294901760
    %v256 = vsub.f32 %v254, %v255
    %v257 = vand.u32 %v256, 4294901760
    %258 = vmatprep.subr.mxu0 %v257
    %v259 = vand.u32 %v77, 4294901760
    %v260 = vsub.f32 %v77, %v259
    %v261 = vand.u32 %v260, 4294901760
    %v262 = vsub.f32 %v260, %v261
    %v263 = vand.u32 %v262, 4294901760
    %264 = vmatpush1.msra.mxu0 %v263
    %v265 = vand.u32 %v86, 4294901760
    %v266 = vsub.f32 %v86, %v265
    %v267 = vand.u32 %v266, 4294901760
    %v268 = vsub.f32 %v266, %v267
    %v269 = vand.u32 %v268, 4294901760
    %270 = vmatprep.subr.mxu0 %v269
    %v271 = vand.u32 %v85, 4294901760
    %v272 = vsub.f32 %v85, %v271
    %v273 = vand.u32 %v272, 4294901760
    %v274 = vsub.f32 %v272, %v273
    %v275 = vand.u32 %v274, 4294901760
    %276 = vmatpush1.msra.mxu0 %v275
    %v277 = vand.u32 %v94, 4294901760
    %v278 = vsub.f32 %v94, %v277
    %v279 = vand.u32 %v278, 4294901760
    %v280 = vsub.f32 %v278, %v279
    %v281 = vand.u32 %v280, 4294901760
    %282 = vmatprep.subr.mxu0 %v281
    %v283 = vand.u32 %v93, 4294901760
    %v284 = vsub.f32 %v93, %v283
    %v285 = vand.u32 %v284, 4294901760
    %v286 = vsub.f32 %v284, %v285
    %v287 = vand.u32 %v286, 4294901760
    %288 = vmatpush1.msra.mxu0 %v287
    %v289 = vand.u32 %v102, 4294901760
    %v290 = vsub.f32 %v102, %v289
    %v291 = vand.u32 %v290, 4294901760
    %v292 = vsub.f32 %v290, %v291
    %v293 = vand.u32 %v292, 4294901760
    %294 = vmatprep.subr.mxu0 %v293
    %v295 = vand.u32 %v101, 4294901760
    %v296 = vsub.f32 %v101, %v295
    %v297 = vand.u32 %v296, 4294901760
    %v298 = vsub.f32 %v296, %v297
    %v299 = vand.u32 %v298, 4294901760
    %300 = vmatpush1.msra.mxu0 %v299
    %301 = vmatprep.subr.mxu0 0.0
    %302 = vmatpush1.msra.mxu0 0.0
    %303 = vmatprep.subr.mxu0 0.0
    %304 = vmatpush1.msra.mxu0 0.0
    %305 = vmatprep.subr.mxu0 0.0
    %306 = vmatpush1.msra.mxu0 0.0
    %307 = vmatprep.subr.mxu0 0.0
    %308 = vmatpush1.msra.mxu0 0.0
    %309 = vmatprep.subr.mxu0 0.0
    %310 = vmatpush1.msra.mxu0 0.0
    %311 = vmatprep.subr.mxu0 0.0
    %312 = vmatpush1.msra.mxu0 0.0
    %313 = vmatprep.subr.mxu0 0.0
    %314 = vmatpush1.msra.mxu0 0.0
    %315 = vmatprep.subr.mxu0 0.0
    %316 = vmatpush1.msra.mxu0 0.0
    %317 = vmatprep.subr.mxu0 0.0
    %318 = vmatpush1.msra.mxu0 0.0
    %319 = vmatprep.subr.mxu0 0.0
    %320 = vmatpush1.msra.mxu0 0.0
    %321 = vmatprep.subr.mxu0 0.0
    %322 = vmatpush1.msra.mxu0 0.0
    %323 = vmatprep.subr.mxu0 0.0
    %324 = vmatpush1.msra.mxu0 0.0
    %325 = vmatprep.subr.mxu0 0.0
    %326 = vmatpush1.msra.mxu0 0.0
    %327 = vmatprep.subr.mxu0 0.0
    %328 = vmatpush1.msra.mxu0 0.0
    %329 = vmatprep.subr.mxu0 0.0
    %330 = vmatpush1.msra.mxu0 0.0
    %331 = vmatprep.subr.mxu0 0.0
    %332 = vmatpush1.msra.mxu0 0.0
    %333 = vmatprep.subr.mxu0 0.0
    %334 = vmatpush1.msra.mxu0 0.0
    %335 = vmatprep.subr.mxu0 0.0
    %336 = vmatpush1.msra.mxu0 0.0
    %337 = vmatprep.subr.mxu0 0.0
    %338 = vmatpush1.msra.mxu0 0.0
    %339 = vmatprep.subr.mxu0 0.0
    %340 = vmatpush1.msra.mxu0 0.0
    %341 = vmatprep.subr.mxu0 0.0
    %342 = vmatpush1.msra.mxu0 0.0
    %343 = vmatprep.subr.mxu0 0.0
    %344 = vmatpush1.msra.mxu0 0.0
    %345 = vmatprep.subr.mxu0 0.0
    %346 = vmatpush1.msra.mxu0 0.0
    %347 = vmatprep.subr.mxu0 0.0
    %348 = vmatpush1.msra.mxu0 0.0
    %349 = vmatprep.mubr.f32.mxu0 0.0
    %v350 = vand.u32 %v111, 4294901760
    %351 = vmatmul.mubr.f32.gmra.mrb[0].mxu0 %v350
    %v352 = vpop.f32.mrb[0].mxu0
    %v353 = vadd.f32 %v201, %v352
    %v354 = vpop.f32.mrb[0].mxu0
    %v355 = vadd.f32 %v203, %v354
    %356 = vdwg.mxu0
    %v357 = vand.u32 %v46, 4294901760
    %v358 = vsub.f32 %v46, %v357
    %359 = vmatprep.subr.mxu0 %v358
    %v360 = vand.u32 %v45, 4294901760
    %v361 = vsub.f32 %v45, %v360
    %362 = vmatpush1.msra.mxu0 %v361
    %v363 = vand.u32 %v54, 4294901760
    %v364 = vsub.f32 %v54, %v363
    %365 = vmatprep.subr.mxu0 %v364
    %v366 = vand.u32 %v53, 4294901760
    %v367 = vsub.f32 %v53, %v366
    %368 = vmatpush1.msra.mxu0 %v367
    %v369 = vand.u32 %v62, 4294901760
    %v370 = vsub.f32 %v62, %v369
    %371 = vmatprep.subr.mxu0 %v370
    %v372 = vand.u32 %v61, 4294901760
    %v373 = vsub.f32 %v61, %v372
    %374 = vmatpush1.msra.mxu0 %v373
    %v375 = vand.u32 %v70, 4294901760
    %v376 = vsub.f32 %v70, %v375
    %377 = vmatprep.subr.mxu0 %v376
    %v378 = vand.u32 %v69, 4294901760
    %v379 = vsub.f32 %v69, %v378
    %380 = vmatpush1.msra.mxu0 %v379
    %v381 = vand.u32 %v78, 4294901760
    %v382 = vsub.f32 %v78, %v381
    %383 = vmatprep.subr.mxu0 %v382
    %v384 = vand.u32 %v77, 4294901760
    %v385 = vsub.f32 %v77, %v384
    %386 = vmatpush1.msra.mxu0 %v385
    %v387 = vand.u32 %v86, 4294901760
    %v388 = vsub.f32 %v86, %v387
    %389 = vmatprep.subr.mxu0 %v388
    %v390 = vand.u32 %v85, 4294901760
    %v391 = vsub.f32 %v85, %v390
    %392 = vmatpush1.msra.mxu0 %v391
    %v393 = vand.u32 %v94, 4294901760
    %v394 = vsub.f32 %v94, %v393
    %395 = vmatprep.subr.mxu0 %v394
    %v396 = vand.u32 %v93, 4294901760
    %v397 = vsub.f32 %v93, %v396
    %398 = vmatpush1.msra.mxu0 %v397
    %v399 = vand.u32 %v102, 4294901760
    %v400 = vsub.f32 %v102, %v399
    %401 = vmatprep.subr.mxu0 %v400
    %v402 = vand.u32 %v101, 4294901760
    %v403 = vsub.f32 %v101, %v402
    %404 = vmatpush1.msra.mxu0 %v403
    %405 = vmatprep.subr.mxu0 0.0
    %406 = vmatpush1.msra.mxu0 0.0
    %407 = vmatprep.subr.mxu0 0.0
    %408 = vmatpush1.msra.mxu0 0.0
    %409 = vmatprep.subr.mxu0 0.0
    %410 = vmatpush1.msra.mxu0 0.0
    %411 = vmatprep.subr.mxu0 0.0
    %412 = vmatpush1.msra.mxu0 0.0
    %413 = vmatprep.subr.mxu0 0.0
    %414 = vmatpush1.msra.mxu0 0.0
    %415 = vmatprep.subr.mxu0 0.0
    %416 = vmatpush1.msra.mxu0 0.0
    %417 = vmatprep.subr.mxu0 0.0
    %418 = vmatpush1.msra.mxu0 0.0
    %419 = vmatprep.subr.mxu0 0.0
    %420 = vmatpush1.msra.mxu0 0.0
    %421 = vmatprep.subr.mxu0 0.0
    %422 = vmatpush1.msra.mxu0 0.0
    %423 = vmatprep.subr.mxu0 0.0
    %424 = vmatpush1.msra.mxu0 0.0
    %425 = vmatprep.subr.mxu0 0.0
    %426 = vmatpush1.msra.mxu0 0.0
    %427 = vmatprep.subr.mxu0 0.0
    %428 = vmatpush1.msra.mxu0 0.0
    %429 = vmatprep.subr.mxu0 0.0
    %430 = vmatpush1.msra.mxu0 0.0
    %431 = vmatprep.subr.mxu0 0.0
    %432 = vmatpush1.msra.mxu0 0.0
    %433 = vmatprep.subr.mxu0 0.0
    %434 = vmatpush1.msra.mxu0 0.0
    %435 = vmatprep.subr.mxu0 0.0
    %436 = vmatpush1.msra.mxu0 0.0
    %437 = vmatprep.subr.mxu0 0.0
    %438 = vmatpush1.msra.mxu0 0.0
    %439 = vmatprep.subr.mxu0 0.0
    %440 = vmatpush1.msra.mxu0 0.0
    %441 = vmatprep.subr.mxu0 0.0
    %442 = vmatpush1.msra.mxu0 0.0
    %443 = vmatprep.subr.mxu0 0.0
    %444 = vmatpush1.msra.mxu0 0.0
    %445 = vmatprep.subr.mxu0 0.0
    %446 = vmatpush1.msra.mxu0 0.0
    %447 = vmatprep.subr.mxu0 0.0
    %448 = vmatpush1.msra.mxu0 0.0
    %449 = vmatprep.subr.mxu0 0.0
    %450 = vmatpush1.msra.mxu0 0.0
    %451 = vmatprep.subr.mxu0 0.0
    %452 = vmatpush1.msra.mxu0 0.0
    %453 = vmatprep.mubr.f32.mxu0 0.0
    %v454 = vand.u32 %v111, 4294901760
    %v455 = vsub.f32 %v111, %v454
    %456 = vmatmul.mubr.f32.gmra.mrb[0].mxu0 %v455
    %v457 = vpop.f32.mrb[0].mxu0
    %v458 = vadd.f32 %v353, %v457
    %v459 = vpop.f32.mrb[0].mxu0
    %v460 = vadd.f32 %v355, %v459
    %461 = vdwg.mxu0
    %v462 = vand.u32 %v46, 4294901760
    %463 = vmatprep.subr.mxu0 %v462
    %v464 = vand.u32 %v45, 4294901760
    %465 = vmatpush1.msra.mxu0 %v464
    %v466 = vand.u32 %v54, 4294901760
    %467 = vmatprep.subr.mxu0 %v466
    %v468 = vand.u32 %v53, 4294901760
    %469 = vmatpush1.msra.mxu0 %v468
    %v470 = vand.u32 %v62, 4294901760
    %471 = vmatprep.subr.mxu0 %v470
    %v472 = vand.u32 %v61, 4294901760
    %473 = vmatpush1.msra.mxu0 %v472
    %v474 = vand.u32 %v70, 4294901760
    %475 = vmatprep.subr.mxu0 %v474
    %v476 = vand.u32 %v69, 4294901760
    %477 = vmatpush1.msra.mxu0 %v476
    %v478 = vand.u32 %v78, 4294901760
    %479 = vmatprep.subr.mxu0 %v478
    %v480 = vand.u32 %v77, 4294901760
    %481 = vmatpush1.msra.mxu0 %v480
    %v482 = vand.u32 %v86, 4294901760
    %483 = vmatprep.subr.mxu0 %v482
    %v484 = vand.u32 %v85, 4294901760
    %485 = vmatpush1.msra.mxu0 %v484
    %v486 = vand.u32 %v94, 4294901760
    %487 = vmatprep.subr.mxu0 %v486
    %v488 = vand.u32 %v93, 4294901760
    %489 = vmatpush1.msra.mxu0 %v488
    %v490 = vand.u32 %v102, 4294901760
    %491 = vmatprep.subr.mxu0 %v490
    %v492 = vand.u32 %v101, 4294901760
    %493 = vmatpush1.msra.mxu0 %v492
    %494 = vmatprep.subr.mxu0 0.0
    %495 = vmatpush1.msra.mxu0 0.0
    %496 = vmatprep.subr.mxu0 0.0
    %497 = vmatpush1.msra.mxu0 0.0
    %498 = vmatprep.subr.mxu0 0.0
    %499 = vmatpush1.msra.mxu0 0.0
    %500 = vmatprep.subr.mxu0 0.0
    %501 = vmatpush1.msra.mxu0 0.0
    %502 = vmatprep.subr.mxu0 0.0
    %503 = vmatpush1.msra.mxu0 0.0
    %504 = vmatprep.subr.mxu0 0.0
    %505 = vmatpush1.msra.mxu0 0.0
    %506 = vmatprep.subr.mxu0 0.0
    %507 = vmatpush1.msra.mxu0 0.0
    %508 = vmatprep.subr.mxu0 0.0
    %509 = vmatpush1.msra.mxu0 0.0
    %510 = vmatprep.subr.mxu0 0.0
    %511 = vmatpush1.msra.mxu0 0.0
    %512 = vmatprep.subr.mxu0 0.0
    %513 = vmatpush1.msra.mxu0 0.0
    %514 = vmatprep.subr.mxu0 0.0
    %515 = vmatpush1.msra.mxu0 0.0
    %516 = vmatprep.subr.mxu0 0.0
    %517 = vmatpush1.msra.mxu0 0.0
    %518 = vmatprep.subr.mxu0 0.0
    %519 = vmatpush1.msra.mxu0 0.0
    %520 = vmatprep.subr.mxu0 0.0
    %521 = vmatpush1.msra.mxu0 0.0
    %522 = vmatprep.subr.mxu0 0.0
    %523 = vmatpush1.msra.mxu0 0.0
    %524 = vmatprep.subr.mxu0 0.0
    %525 = vmatpush1.msra.mxu0 0.0
    %526 = vmatprep.subr.mxu0 0.0
    %527 = vmatpush1.msra.mxu0 0.0
    %528 = vmatprep.subr.mxu0 0.0
    %529 = vmatpush1.msra.mxu0 0.0
    %530 = vmatprep.subr.mxu0 0.0
    %531 = vmatpush1.msra.mxu0 0.0
    %532 = vmatprep.subr.mxu0 0.0
    %533 = vmatpush1.msra.mxu0 0.0
    %534 = vmatprep.subr.mxu0 0.0
    %535 = vmatpush1.msra.mxu0 0.0
    %536 = vmatprep.subr.mxu0 0.0
    %537 = vmatpush1.msra.mxu0 0.0
    %538 = vmatprep.subr.mxu0 0.0
    %539 = vmatpush1.msra.mxu0 0.0
    %540 = vmatprep.subr.mxu0 0.0
    %541 = vmatpush1.msra.mxu0 0.0
    %542 = vmatprep.mubr.f32.mxu0 0.0
    %v543 = vand.u32 %v111, 4294901760
    %v544 = vsub.f32 %v111, %v543
    %v545 = vand.u32 %v544, 4294901760
    %546 = vmatmul.mubr.f32.gmra.mrb[0].mxu0 %v545
    %v547 = vpop.f32.mrb[0].mxu0
    %v548 = vadd.f32 %v458, %v547
    %v549 = vpop.f32.mrb[0].mxu0
    %v550 = vadd.f32 %v460, %v549
    %551 = vdwg.mxu0
    %v552 = vand.u32 %v46, 4294901760
    %v553 = vsub.f32 %v46, %v552
    %v554 = vand.u32 %v553, 4294901760
    %555 = vmatprep.subr.mxu0 %v554
    %v556 = vand.u32 %v45, 4294901760
    %v557 = vsub.f32 %v45, %v556
    %v558 = vand.u32 %v557, 4294901760
    %559 = vmatpush1.msra.mxu0 %v558
    %v560 = vand.u32 %v54, 4294901760
    %v561 = vsub.f32 %v54, %v560
    %v562 = vand.u32 %v561, 4294901760
    %563 = vmatprep.subr.mxu0 %v562
    %v564 = vand.u32 %v53, 4294901760
    %v565 = vsub.f32 %v53, %v564
    %v566 = vand.u32 %v565, 4294901760
    %567 = vmatpush1.msra.mxu0 %v566
    %v568 = vand.u32 %v62, 4294901760
    %v569 = vsub.f32 %v62, %v568
    %v570 = vand.u32 %v569, 4294901760
    %571 = vmatprep.subr.mxu0 %v570
    %v572 = vand.u32 %v61, 4294901760
    %v573 = vsub.f32 %v61, %v572
    %v574 = vand.u32 %v573, 4294901760
    %575 = vmatpush1.msra.mxu0 %v574
    %v576 = vand.u32 %v70, 4294901760
    %v577 = vsub.f32 %v70, %v576
    %v578 = vand.u32 %v577, 4294901760
    %579 = vmatprep.subr.mxu0 %v578
    %v580 = vand.u32 %v69, 4294901760
    %v581 = vsub.f32 %v69, %v580
    %v582 = vand.u32 %v581, 4294901760
    %583 = vmatpush1.msra.mxu0 %v582
    %v584 = vand.u32 %v78, 4294901760
    %v585 = vsub.f32 %v78, %v584
    %v586 = vand.u32 %v585, 4294901760
    %587 = vmatprep.subr.mxu0 %v586
    %v588 = vand.u32 %v77, 4294901760
    %v589 = vsub.f32 %v77, %v588
    %v590 = vand.u32 %v589, 4294901760
    %591 = vmatpush1.msra.mxu0 %v590
    %v592 = vand.u32 %v86, 4294901760
    %v593 = vsub.f32 %v86, %v592
    %v594 = vand.u32 %v593, 4294901760
    %595 = vmatprep.subr.mxu0 %v594
    %v596 = vand.u32 %v85, 4294901760
    %v597 = vsub.f32 %v85, %v596
    %v598 = vand.u32 %v597, 4294901760
    %599 = vmatpush1.msra.mxu0 %v598
    %v600 = vand.u32 %v94, 4294901760
    %v601 = vsub.f32 %v94, %v600
    %v602 = vand.u32 %v601, 4294901760
    %603 = vmatprep.subr.mxu0 %v602
    %v604 = vand.u32 %v93, 4294901760
    %v605 = vsub.f32 %v93, %v604
    %v606 = vand.u32 %v605, 4294901760
    %607 = vmatpush1.msra.mxu0 %v606
    %v608 = vand.u32 %v102, 4294901760
    %v609 = vsub.f32 %v102, %v608
    %v610 = vand.u32 %v609, 4294901760
    %611 = vmatprep.subr.mxu0 %v610
    %v612 = vand.u32 %v101, 4294901760
    %v613 = vsub.f32 %v101, %v612
    %v614 = vand.u32 %v613, 4294901760
    %615 = vmatpush1.msra.mxu0 %v614
    %616 = vmatprep.subr.mxu0 0.0
    %617 = vmatpush1.msra.mxu0 0.0
    %618 = vmatprep.subr.mxu0 0.0
    %619 = vmatpush1.msra.mxu0 0.0
    %620 = vmatprep.subr.mxu0 0.0
    %621 = vmatpush1.msra.mxu0 0.0
    %622 = vmatprep.subr.mxu0 0.0
    %623 = vmatpush1.msra.mxu0 0.0
    %624 = vmatprep.subr.mxu0 0.0
    %625 = vmatpush1.msra.mxu0 0.0
    %626 = vmatprep.subr.mxu0 0.0
    %627 = vmatpush1.msra.mxu0 0.0
    %628 = vmatprep.subr.mxu0 0.0
    %629 = vmatpush1.msra.mxu0 0.0
    %630 = vmatprep.subr.mxu0 0.0
    %631 = vmatpush1.msra.mxu0 0.0
    %632 = vmatprep.subr.mxu0 0.0
    %633 = vmatpush1.msra.mxu0 0.0
    %634 = vmatprep.subr.mxu0 0.0
    %635 = vmatpush1.msra.mxu0 0.0
    %636 = vmatprep.subr.mxu0 0.0
    %637 = vmatpush1.msra.mxu0 0.0
    %638 = vmatprep.subr.mxu0 0.0
    %639 = vmatpush1.msra.mxu0 0.0
    %640 = vmatprep.subr.mxu0 0.0
    %641 = vmatpush1.msra.mxu0 0.0
    %642 = vmatprep.subr.mxu0 0.0
    %643 = vmatpush1.msra.mxu0 0.0
    %644 = vmatprep.subr.mxu0 0.0
    %645 = vmatpush1.msra.mxu0 0.0
    %646 = vmatprep.subr.mxu0 0.0
    %647 = vmatpush1.msra.mxu0 0.0
    %648 = vmatprep.subr.mxu0 0.0
    %649 = vmatpush1.msra.mxu0 0.0
    %650 = vmatprep.subr.mxu0 0.0
    %651 = vmatpush1.msra.mxu0 0.0
    %652 = vmatprep.subr.mxu0 0.0
    %653 = vmatpush1.msra.mxu0 0.0
    %654 = vmatprep.subr.mxu0 0.0
    %655 = vmatpush1.msra.mxu0 0.0
    %656 = vmatprep.subr.mxu0 0.0
    %657 = vmatpush1.msra.mxu0 0.0
    %658 = vmatprep.subr.mxu0 0.0
    %659 = vmatpush1.msra.mxu0 0.0
    %660 = vmatprep.subr.mxu0 0.0
    %661 = vmatpush1.msra.mxu0 0.0
    %662 = vmatprep.subr.mxu0 0.0
    %663 = vmatpush1.msra.mxu0 0.0
    %664 = vmatprep.mubr.f32.mxu0 0.0
    %v665 = vand.u32 %v111, 4294901760
    %666 = vmatmul.mubr.f32.gmra.mrb[0].mxu0 %v665
    %v667 = vpop.f32.mrb[0].mxu0
    %v668 = vadd.f32 %v548, %v667
    %v669 = vpop.f32.mrb[0].mxu0
    %v670 = vadd.f32 %v550, %v669
    %671 = vdwg.mxu0
    %v672 = vand.u32 %v46, 4294901760
    %673 = vmatprep.subr.mxu0 %v672
    %v674 = vand.u32 %v45, 4294901760
    %675 = vmatpush1.msra.mxu0 %v674
    %v676 = vand.u32 %v54, 4294901760
    %677 = vmatprep.subr.mxu0 %v676
    %v678 = vand.u32 %v53, 4294901760
    %679 = vmatpush1.msra.mxu0 %v678
    %v680 = vand.u32 %v62, 4294901760
    %681 = vmatprep.subr.mxu0 %v680
    %v682 = vand.u32 %v61, 4294901760
    %683 = vmatpush1.msra.mxu0 %v682
    %v684 = vand.u32 %v70, 4294901760
    %685 = vmatprep.subr.mxu0 %v684
    %v686 = vand.u32 %v69, 4294901760
    %687 = vmatpush1.msra.mxu0 %v686
    %v688 = vand.u32 %v78, 4294901760
    %689 = vmatprep.subr.mxu0 %v688
    %v690 = vand.u32 %v77, 4294901760
    %691 = vmatpush1.msra.mxu0 %v690
    %v692 = vand.u32 %v86, 4294901760
    %693 = vmatprep.subr.mxu0 %v692
    %v694 = vand.u32 %v85, 4294901760
    %695 = vmatpush1.msra.mxu0 %v694
    %v696 = vand.u32 %v94, 4294901760
    %697 = vmatprep.subr.mxu0 %v696
    %v698 = vand.u32 %v93, 4294901760
    %699 = vmatpush1.msra.mxu0 %v698
    %v700 = vand.u32 %v102, 4294901760
    %701 = vmatprep.subr.mxu0 %v700
    %v702 = vand.u32 %v101, 4294901760
    %703 = vmatpush1.msra.mxu0 %v702
    %704 = vmatprep.subr.mxu0 0.0
    %705 = vmatpush1.msra.mxu0 0.0
    %706 = vmatprep.subr.mxu0 0.0
    %707 = vmatpush1.msra.mxu0 0.0
    %708 = vmatprep.subr.mxu0 0.0
    %709 = vmatpush1.msra.mxu0 0.0
    %710 = vmatprep.subr.mxu0 0.0
    %711 = vmatpush1.msra.mxu0 0.0
    %712 = vmatprep.subr.mxu0 0.0
    %713 = vmatpush1.msra.mxu0 0.0
    %714 = vmatprep.subr.mxu0 0.0
    %715 = vmatpush1.msra.mxu0 0.0
    %716 = vmatprep.subr.mxu0 0.0
    %717 = vmatpush1.msra.mxu0 0.0
    %718 = vmatprep.subr.mxu0 0.0
    %719 = vmatpush1.msra.mxu0 0.0
    %720 = vmatprep.subr.mxu0 0.0
    %721 = vmatpush1.msra.mxu0 0.0
    %722 = vmatprep.subr.mxu0 0.0
    %723 = vmatpush1.msra.mxu0 0.0
    %724 = vmatprep.subr.mxu0 0.0
    %725 = vmatpush1.msra.mxu0 0.0
    %726 = vmatprep.subr.mxu0 0.0
    %727 = vmatpush1.msra.mxu0 0.0
    %728 = vmatprep.subr.mxu0 0.0
    %729 = vmatpush1.msra.mxu0 0.0
    %730 = vmatprep.subr.mxu0 0.0
    %731 = vmatpush1.msra.mxu0 0.0
    %732 = vmatprep.subr.mxu0 0.0
    %733 = vmatpush1.msra.mxu0 0.0
    %734 = vmatprep.subr.mxu0 0.0
    %735 = vmatpush1.msra.mxu0 0.0
    %736 = vmatprep.subr.mxu0 0.0
    %737 = vmatpush1.msra.mxu0 0.0
    %738 = vmatprep.subr.mxu0 0.0
    %739 = vmatpush1.msra.mxu0 0.0
    %740 = vmatprep.subr.mxu0 0.0
    %741 = vmatpush1.msra.mxu0 0.0
    %742 = vmatprep.subr.mxu0 0.0
    %743 = vmatpush1.msra.mxu0 0.0
    %744 = vmatprep.subr.mxu0 0.0
    %745 = vmatpush1.msra.mxu0 0.0
    %746 = vmatprep.subr.mxu0 0.0
    %747 = vmatpush1.msra.mxu0 0.0
    %748 = vmatprep.subr.mxu0 0.0
    %749 = vmatpush1.msra.mxu0 0.0
    %750 = vmatprep.subr.mxu0 0.0
    %751 = vmatpush1.msra.mxu0 0.0
    %752 = vmatprep.mubr.f32.mxu0 0.0
    %v753 = vand.u32 %v111, 4294901760
    %754 = vmatmul.mubr.f32.gmra.mrb[0].mxu0 %v753
    %v755 = vpop.f32.mrb[0].mxu0
    %v756 = vadd.f32 %v668, %v755
    %v757 = vpop.f32.mrb[0].mxu0
    %v758 = vadd.f32 %v670, %v757
    %759 = vdwg.mxu0
    %v760 = vand.u32 %v48, 4294901760
    %761 = vmatprep.subr.mxu0 %v760
    %v762 = vand.u32 %v47, 4294901760
    %763 = vmatpush1.msra.mxu0 %v762
    %v764 = vand.u32 %v56, 4294901760
    %765 = vmatprep.subr.mxu0 %v764
    %v766 = vand.u32 %v55, 4294901760
    %767 = vmatpush1.msra.mxu0 %v766
    %v768 = vand.u32 %v64, 4294901760
    %769 = vmatprep.subr.mxu0 %v768
    %v770 = vand.u32 %v63, 4294901760
    %771 = vmatpush1.msra.mxu0 %v770
    %v772 = vand.u32 %v72, 4294901760
    %773 = vmatprep.subr.mxu0 %v772
    %v774 = vand.u32 %v71, 4294901760
    %775 = vmatpush1.msra.mxu0 %v774
    %v776 = vand.u32 %v80, 4294901760
    %777 = vmatprep.subr.mxu0 %v776
    %v778 = vand.u32 %v79, 4294901760
    %779 = vmatpush1.msra.mxu0 %v778
    %v780 = vand.u32 %v88, 4294901760
    %781 = vmatprep.subr.mxu0 %v780
    %v782 = vand.u32 %v87, 4294901760
    %783 = vmatpush1.msra.mxu0 %v782
    %v784 = vand.u32 %v96, 4294901760
    %785 = vmatprep.subr.mxu0 %v784
    %v786 = vand.u32 %v95, 4294901760
    %787 = vmatpush1.msra.mxu0 %v786
    %v788 = vand.u32 %v104, 4294901760
    %789 = vmatprep.subr.mxu0 %v788
    %v790 = vand.u32 %v103, 4294901760
    %791 = vmatpush1.msra.mxu0 %v790
    %792 = vmatprep.subr.mxu0 0.0
    %793 = vmatpush1.msra.mxu0 0.0
    %794 = vmatprep.subr.mxu0 0.0
    %795 = vmatpush1.msra.mxu0 0.0
    %796 = vmatprep.subr.mxu0 0.0
    %797 = vmatpush1.msra.mxu0 0.0
    %798 = vmatprep.subr.mxu0 0.0
    %799 = vmatpush1.msra.mxu0 0.0
    %800 = vmatprep.subr.mxu0 0.0
    %801 = vmatpush1.msra.mxu0 0.0
    %802 = vmatprep.subr.mxu0 0.0
    %803 = vmatpush1.msra.mxu0 0.0
    %804 = vmatprep.subr.mxu0 0.0
    %805 = vmatpush1.msra.mxu0 0.0
    %806 = vmatprep.subr.mxu0 0.0
    %807 = vmatpush1.msra.mxu0 0.0
    %808 = vmatprep.subr.mxu0 0.0
    %809 = vmatpush1.msra.mxu0 0.0
    %810 = vmatprep.subr.mxu0 0.0
    %811 = vmatpush1.msra.mxu0 0.0
    %812 = vmatprep.subr.mxu0 0.0
    %813 = vmatpush1.msra.mxu0 0.0
    %814 = vmatprep.subr.mxu0 0.0
    %815 = vmatpush1.msra.mxu0 0.0
    %816 = vmatprep.subr.mxu0 0.0
    %817 = vmatpush1.msra.mxu0 0.0
    %818 = vmatprep.subr.mxu0 0.0
    %819 = vmatpush1.msra.mxu0 0.0
    %820 = vmatprep.subr.mxu0 0.0
    %821 = vmatpush1.msra.mxu0 0.0
    %822 = vmatprep.subr.mxu0 0.0
    %823 = vmatpush1.msra.mxu0 0.0
    %824 = vmatprep.subr.mxu0 0.0
    %825 = vmatpush1.msra.mxu0 0.0
    %826 = vmatprep.subr.mxu0 0.0
    %827 = vmatpush1.msra.mxu0 0.0
    %828 = vmatprep.subr.mxu0 0.0
    %829 = vmatpush1.msra.mxu0 0.0
    %830 = vmatprep.subr.mxu0 0.0
    %831 = vmatpush1.msra.mxu0 0.0
    %832 = vmatprep.subr.mxu0 0.0
    %833 = vmatpush1.msra.mxu0 0.0
    %834 = vmatprep.subr.mxu0 0.0
    %835 = vmatpush1.msra.mxu0 0.0
    %836 = vmatprep.subr.mxu0 0.0
    %837 = vmatpush1.msra.mxu0 0.0
    %838 = vmatprep.subr.mxu0 0.0
    %839 = vmatpush1.msra.mxu0 0.0
    %840 = vmatprep.mubr.f32.mxu0 0.0
    %v841 = vand.u32 %v111, 4294901760
    %v842 = vsub.f32 %v111, %v841
    %v843 = vand.u32 %v842, 4294901760
    %v844 = vsub.f32 %v842, %v843
    %v845 = vand.u32 %v844, 4294901760
    %846 = vmatmul.mubr.f32.gmra.mrb[0].mxu0 %v845
    %v847 = vpop.f32.mrb[0].mxu0
    %v848 = vadd.f32 0.0, %v847
    %v849 = vpop.f32.mrb[0].mxu0
    %v850 = vadd.f32 0.0, %v849
    %851 = vdwg.mxu0
    %v852 = vand.u32 %v48, 4294901760
    %v853 = vsub.f32 %v48, %v852
    %v854 = vand.u32 %v853, 4294901760
    %v855 = vsub.f32 %v853, %v854
    %v856 = vand.u32 %v855, 4294901760
    %857 = vmatprep.subr.mxu0 %v856
    %v858 = vand.u32 %v47, 4294901760
    %v859 = vsub.f32 %v47, %v858
    %v860 = vand.u32 %v859, 4294901760
    %v861 = vsub.f32 %v859, %v860
    %v862 = vand.u32 %v861, 4294901760
    %863 = vmatpush1.msra.mxu0 %v862
    %v864 = vand.u32 %v56, 4294901760
    %v865 = vsub.f32 %v56, %v864
    %v866 = vand.u32 %v865, 4294901760
    %v867 = vsub.f32 %v865, %v866
    %v868 = vand.u32 %v867, 4294901760
    %869 = vmatprep.subr.mxu0 %v868
    %v870 = vand.u32 %v55, 4294901760
    %v871 = vsub.f32 %v55, %v870
    %v872 = vand.u32 %v871, 4294901760
    %v873 = vsub.f32 %v871, %v872
    %v874 = vand.u32 %v873, 4294901760
    %875 = vmatpush1.msra.mxu0 %v874
    %v876 = vand.u32 %v64, 4294901760
    %v877 = vsub.f32 %v64, %v876
    %v878 = vand.u32 %v877, 4294901760
    %v879 = vsub.f32 %v877, %v878
    %v880 = vand.u32 %v879, 4294901760
    %881 = vmatprep.subr.mxu0 %v880
    %v882 = vand.u32 %v63, 4294901760
    %v883 = vsub.f32 %v63, %v882
    %v884 = vand.u32 %v883, 4294901760
    %v885 = vsub.f32 %v883, %v884
    %v886 = vand.u32 %v885, 4294901760
    %887 = vmatpush1.msra.mxu0 %v886
    %v888 = vand.u32 %v72, 4294901760
    %v889 = vsub.f32 %v72, %v888
    %v890 = vand.u32 %v889, 4294901760
    %v891 = vsub.f32 %v889, %v890
    %v892 = vand.u32 %v891, 4294901760
    %893 = vmatprep.subr.mxu0 %v892
    %v894 = vand.u32 %v71, 4294901760
    %v895 = vsub.f32 %v71, %v894
    %v896 = vand.u32 %v895, 4294901760
    %v897 = vsub.f32 %v895, %v896
    %v898 = vand.u32 %v897, 4294901760
    %899 = vmatpush1.msra.mxu0 %v898
    %v900 = vand.u32 %v80, 4294901760
    %v901 = vsub.f32 %v80, %v900
    %v902 = vand.u32 %v901, 4294901760
    %v903 = vsub.f32 %v901, %v902
    %v904 = vand.u32 %v903, 4294901760
    %905 = vmatprep.subr.mxu0 %v904
    %v906 = vand.u32 %v79, 4294901760
    %v907 = vsub.f32 %v79, %v906
    %v908 = vand.u32 %v907, 4294901760
    %v909 = vsub.f32 %v907, %v908
    %v910 = vand.u32 %v909, 4294901760
    %911 = vmatpush1.msra.mxu0 %v910
    %v912 = vand.u32 %v88, 4294901760
    %v913 = vsub.f32 %v88, %v912
    %v914 = vand.u32 %v913, 4294901760
    %v915 = vsub.f32 %v913, %v914
    %v916 = vand.u32 %v915, 4294901760
    %917 = vmatprep.subr.mxu0 %v916
    %v918 = vand.u32 %v87, 4294901760
    %v919 = vsub.f32 %v87, %v918
    %v920 = vand.u32 %v919, 4294901760
    %v921 = vsub.f32 %v919, %v920
    %v922 = vand.u32 %v921, 4294901760
    %923 = vmatpush1.msra.mxu0 %v922
    %v924 = vand.u32 %v96, 4294901760
    %v925 = vsub.f32 %v96, %v924
    %v926 = vand.u32 %v925, 4294901760
    %v927 = vsub.f32 %v925, %v926
    %v928 = vand.u32 %v927, 4294901760
    %929 = vmatprep.subr.mxu0 %v928
    %v930 = vand.u32 %v95, 4294901760
    %v931 = vsub.f32 %v95, %v930
    %v932 = vand.u32 %v931, 4294901760
    %v933 = vsub.f32 %v931, %v932
    %v934 = vand.u32 %v933, 4294901760
    %935 = vmatpush1.msra.mxu0 %v934
    %v936 = vand.u32 %v104, 4294901760
    %v937 = vsub.f32 %v104, %v936
    %v938 = vand.u32 %v937, 4294901760
    %v939 = vsub.f32 %v937, %v938
    %v940 = vand.u32 %v939, 4294901760
    %941 = vmatprep.subr.mxu0 %v940
    %v942 = vand.u32 %v103, 4294901760
    %v943 = vsub.f32 %v103, %v942
    %v944 = vand.u32 %v943, 4294901760
    %v945 = vsub.f32 %v943, %v944
    %v946 = vand.u32 %v945, 4294901760
    %947 = vmatpush1.msra.mxu0 %v946
    %948 = vmatprep.subr.mxu0 0.0
    %949 = vmatpush1.msra.mxu0 0.0
    %950 = vmatprep.subr.mxu0 0.0
    %951 = vmatpush1.msra.mxu0 0.0
    %952 = vmatprep.subr.mxu0 0.0
    %953 = vmatpush1.msra.mxu0 0.0
    %954 = vmatprep.subr.mxu0 0.0
    %955 = vmatpush1.msra.mxu0 0.0
    %956 = vmatprep.subr.mxu0 0.0
    %957 = vmatpush1.msra.mxu0 0.0
    %958 = vmatprep.subr.mxu0 0.0
    %959 = vmatpush1.msra.mxu0 0.0
    %960 = vmatprep.subr.mxu0 0.0
    %961 = vmatpush1.msra.mxu0 0.0
    %962 = vmatprep.subr.mxu0 0.0
    %963 = vmatpush1.msra.mxu0 0.0
    %964 = vmatprep.subr.mxu0 0.0
    %965 = vmatpush1.msra.mxu0 0.0
    %966 = vmatprep.subr.mxu0 0.0
    %967 = vmatpush1.msra.mxu0 0.0
    %968 = vmatprep.subr.mxu0 0.0
    %969 = vmatpush1.msra.mxu0 0.0
    %970 = vmatprep.subr.mxu0 0.0
    %971 = vmatpush1.msra.mxu0 0.0
    %972 = vmatprep.subr.mxu0 0.0
    %973 = vmatpush1.msra.mxu0 0.0
    %974 = vmatprep.subr.mxu0 0.0
    %975 = vmatpush1.msra.mxu0 0.0
    %976 = vmatprep.subr.mxu0 0.0
    %977 = vmatpush1.msra.mxu0 0.0
    %978 = vmatprep.subr.mxu0 0.0
    %979 = vmatpush1.msra.mxu0 0.0
    %980 = vmatprep.subr.mxu0 0.0
    %981 = vmatpush1.msra.mxu0 0.0
    %982 = vmatprep.subr.mxu0 0.0
    %983 = vmatpush1.msra.mxu0 0.0
    %984 = vmatprep.subr.mxu0 0.0
    %985 = vmatpush1.msra.mxu0 0.0
    %986 = vmatprep.subr.mxu0 0.0
    %987 = vmatpush1.msra.mxu0 0.0
    %988 = vmatprep.subr.mxu0 0.0
    %989 = vmatpush1.msra.mxu0 0.0
    %990 = vmatprep.subr.mxu0 0.0
    %991 = vmatpush1.msra.mxu0 0.0
    %992 = vmatprep.subr.mxu0 0.0
    %993 = vmatpush1.msra.mxu0 0.0
    %994 = vmatprep.subr.mxu0 0.0
    %995 = vmatpush1.msra.mxu0 0.0
    %996 = vmatprep.mubr.f32.mxu0 0.0
    %v997 = vand.u32 %v111, 4294901760
    %998 = vmatmul.mubr.f32.gmra.mrb[0].mxu0 %v997
    %v999 = vpop.f32.mrb[0].mxu0
    %v1000 = vadd.f32 %v848, %v999
    %v1001 = vpop.f32.mrb[0].mxu0
    %v1002 = vadd.f32 %v850, %v1001
    %1003 = vdwg.mxu0
    %v1004 = vand.u32 %v48, 4294901760
    %v1005 = vsub.f32 %v48, %v1004
    %1006 = vmatprep.subr.mxu0 %v1005
    %v1007 = vand.u32 %v47, 4294901760
    %v1008 = vsub.f32 %v47, %v1007
    %1009 = vmatpush1.msra.mxu0 %v1008
    %v1010 = vand.u32 %v56, 4294901760
    %v1011 = vsub.f32 %v56, %v1010
    %1012 = vmatprep.subr.mxu0 %v1011
    %v1013 = vand.u32 %v55, 4294901760
    %v1014 = vsub.f32 %v55, %v1013
    %1015 = vmatpush1.msra.mxu0 %v1014
    %v1016 = vand.u32 %v64, 4294901760
    %v1017 = vsub.f32 %v64, %v1016
    %1018 = vmatprep.subr.mxu0 %v1017
    %v1019 = vand.u32 %v63, 4294901760
    %v1020 = vsub.f32 %v63, %v1019
    %1021 = vmatpush1.msra.mxu0 %v1020
    %v1022 = vand.u32 %v72, 4294901760
    %v1023 = vsub.f32 %v72, %v1022
    %1024 = vmatprep.subr.mxu0 %v1023
    %v1025 = vand.u32 %v71, 4294901760
    %v1026 = vsub.f32 %v71, %v1025
    %1027 = vmatpush1.msra.mxu0 %v1026
    %v1028 = vand.u32 %v80, 4294901760
    %v1029 = vsub.f32 %v80, %v1028
    %1030 = vmatprep.subr.mxu0 %v1029
    %v1031 = vand.u32 %v79, 4294901760
    %v1032 = vsub.f32 %v79, %v1031
    %1033 = vmatpush1.msra.mxu0 %v1032
    %v1034 = vand.u32 %v88, 4294901760
    %v1035 = vsub.f32 %v88, %v1034
    %1036 = vmatprep.subr.mxu0 %v1035
    %v1037 = vand.u32 %v87, 4294901760
    %v1038 = vsub.f32 %v87, %v1037
    %1039 = vmatpush1.msra.mxu0 %v1038
    %v1040 = vand.u32 %v96, 4294901760
    %v1041 = vsub.f32 %v96, %v1040
    %1042 = vmatprep.subr.mxu0 %v1041
    %v1043 = vand.u32 %v95, 4294901760
    %v1044 = vsub.f32 %v95, %v1043
    %1045 = vmatpush1.msra.mxu0 %v1044
    %v1046 = vand.u32 %v104, 4294901760
    %v1047 = vsub.f32 %v104, %v1046
    %1048 = vmatprep.subr.mxu0 %v1047
    %v1049 = vand.u32 %v103, 4294901760
    %v1050 = vsub.f32 %v103, %v1049
    %1051 = vmatpush1.msra.mxu0 %v1050
    %1052 = vmatprep.subr.mxu0 0.0
    %1053 = vmatpush1.msra.mxu0 0.0
    %1054 = vmatprep.subr.mxu0 0.0
    %1055 = vmatpush1.msra.mxu0 0.0
    %1056 = vmatprep.subr.mxu0 0.0
    %1057 = vmatpush1.msra.mxu0 0.0
    %1058 = vmatprep.subr.mxu0 0.0
    %1059 = vmatpush1.msra.mxu0 0.0
    %1060 = vmatprep.subr.mxu0 0.0
    %1061 = vmatpush1.msra.mxu0 0.0
    %1062 = vmatprep.subr.mxu0 0.0
    %1063 = vmatpush1.msra.mxu0 0.0
    %1064 = vmatprep.subr.mxu0 0.0
    %1065 = vmatpush1.msra.mxu0 0.0
    %1066 = vmatprep.subr.mxu0 0.0
    %1067 = vmatpush1.msra.mxu0 0.0
    %1068 = vmatprep.subr.mxu0 0.0
    %1069 = vmatpush1.msra.mxu0 0.0
    %1070 = vmatprep.subr.mxu0 0.0
    %1071 = vmatpush1.msra.mxu0 0.0
    %1072 = vmatprep.subr.mxu0 0.0
    %1073 = vmatpush1.msra.mxu0 0.0
    %1074 = vmatprep.subr.mxu0 0.0
    %1075 = vmatpush1.msra.mxu0 0.0
    %1076 = vmatprep.subr.mxu0 0.0
    %1077 = vmatpush1.msra.mxu0 0.0
    %1078 = vmatprep.subr.mxu0 0.0
    %1079 = vmatpush1.msra.mxu0 0.0
    %1080 = vmatprep.subr.mxu0 0.0
    %1081 = vmatpush1.msra.mxu0 0.0
    %1082 = vmatprep.subr.mxu0 0.0
    %1083 = vmatpush1.msra.mxu0 0.0
    %1084 = vmatprep.subr.mxu0 0.0
    %1085 = vmatpush1.msra.mxu0 0.0
    %1086 = vmatprep.subr.mxu0 0.0
    %1087 = vmatpush1.msra.mxu0 0.0
    %1088 = vmatprep.subr.mxu0 0.0
    %1089 = vmatpush1.msra.mxu0 0.0
    %1090 = vmatprep.subr.mxu0 0.0
    %1091 = vmatpush1.msra.mxu0 0.0
    %1092 = vmatprep.subr.mxu0 0.0
    %1093 = vmatpush1.msra.mxu0 0.0
    %1094 = vmatprep.subr.mxu0 0.0
    %1095 = vmatpush1.msra.mxu0 0.0
    %1096 = vmatprep.subr.mxu0 0.0
    %1097 = vmatpush1.msra.mxu0 0.0
    %1098 = vmatprep.subr.mxu0 0.0
    %1099 = vmatpush1.msra.mxu0 0.0
    %1100 = vmatprep.mubr.f32.mxu0 0.0
    %v1101 = vand.u32 %v111, 4294901760
    %v1102 = vsub.f32 %v111, %v1101
    %1103 = vmatmul.mubr.f32.gmra.mrb[0].mxu0 %v1102
    %v1104 = vpop.f32.mrb[0].mxu0
    %v1105 = vadd.f32 %v1000, %v1104
    %v1106 = vpop.f32.mrb[0].mxu0
    %v1107 = vadd.f32 %v1002, %v1106
    %1108 = vdwg.mxu0
    %v1109 = vand.u32 %v48, 4294901760
    %1110 = vmatprep.subr.mxu0 %v1109
    %v1111 = vand.u32 %v47, 4294901760
    %1112 = vmatpush1.msra.mxu0 %v1111
    %v1113 = vand.u32 %v56, 4294901760
    %1114 = vmatprep.subr.mxu0 %v1113
    %v1115 = vand.u32 %v55, 4294901760
    %1116 = vmatpush1.msra.mxu0 %v1115
    %v1117 = vand.u32 %v64, 4294901760
    %1118 = vmatprep.subr.mxu0 %v1117
    %v1119 = vand.u32 %v63, 4294901760
    %1120 = vmatpush1.msra.mxu0 %v1119
    %v1121 = vand.u32 %v72, 4294901760
    %1122 = vmatprep.subr.mxu0 %v1121
    %v1123 = vand.u32 %v71, 4294901760
    %1124 = vmatpush1.msra.mxu0 %v1123
    %v1125 = vand.u32 %v80, 4294901760
    %1126 = vmatprep.subr.mxu0 %v1125
    %v1127 = vand.u32 %v79, 4294901760
    %1128 = vmatpush1.msra.mxu0 %v1127
    %v1129 = vand.u32 %v88, 4294901760
    %1130 = vmatprep.subr.mxu0 %v1129
    %v1131 = vand.u32 %v87, 4294901760
    %1132 = vmatpush1.msra.mxu0 %v1131
    %v1133 = vand.u32 %v96, 4294901760
    %1134 = vmatprep.subr.mxu0 %v1133
    %v1135 = vand.u32 %v95, 4294901760
    %1136 = vmatpush1.msra.mxu0 %v1135
    %v1137 = vand.u32 %v104, 4294901760
    %1138 = vmatprep.subr.mxu0 %v1137
    %v1139 = vand.u32 %v103, 4294901760
    %1140 = vmatpush1.msra.mxu0 %v1139
    %1141 = vmatprep.subr.mxu0 0.0
    %1142 = vmatpush1.msra.mxu0 0.0
    %1143 = vmatprep.subr.mxu0 0.0
    %1144 = vmatpush1.msra.mxu0 0.0
    %1145 = vmatprep.subr.mxu0 0.0
    %1146 = vmatpush1.msra.mxu0 0.0
    %1147 = vmatprep.subr.mxu0 0.0
    %1148 = vmatpush1.msra.mxu0 0.0
    %1149 = vmatprep.subr.mxu0 0.0
    %1150 = vmatpush1.msra.mxu0 0.0
    %1151 = vmatprep.subr.mxu0 0.0
    %1152 = vmatpush1.msra.mxu0 0.0
    %1153 = vmatprep.subr.mxu0 0.0
    %1154 = vmatpush1.msra.mxu0 0.0
    %1155 = vmatprep.subr.mxu0 0.0
    %1156 = vmatpush1.msra.mxu0 0.0
    %1157 = vmatprep.subr.mxu0 0.0
    %1158 = vmatpush1.msra.mxu0 0.0
    %1159 = vmatprep.subr.mxu0 0.0
    %1160 = vmatpush1.msra.mxu0 0.0
    %1161 = vmatprep.subr.mxu0 0.0
    %1162 = vmatpush1.msra.mxu0 0.0
    %1163 = vmatprep.subr.mxu0 0.0
    %1164 = vmatpush1.msra.mxu0 0.0
    %1165 = vmatprep.subr.mxu0 0.0
    %1166 = vmatpush1.msra.mxu0 0.0
    %1167 = vmatprep.subr.mxu0 0.0
    %1168 = vmatpush1.msra.mxu0 0.0
    %1169 = vmatprep.subr.mxu0 0.0
    %1170 = vmatpush1.msra.mxu0 0.0
    %1171 = vmatprep.subr.mxu0 0.0
    %1172 = vmatpush1.msra.mxu0 0.0
    %1173 = vmatprep.subr.mxu0 0.0
    %1174 = vmatpush1.msra.mxu0 0.0
    %1175 = vmatprep.subr.mxu0 0.0
    %1176 = vmatpush1.msra.mxu0 0.0
    %1177 = vmatprep.subr.mxu0 0.0
    %1178 = vmatpush1.msra.mxu0 0.0
    %1179 = vmatprep.subr.mxu0 0.0
    %1180 = vmatpush1.msra.mxu0 0.0
    %1181 = vmatprep.subr.mxu0 0.0
    %1182 = vmatpush1.msra.mxu0 0.0
    %1183 = vmatprep.subr.mxu0 0.0
    %1184 = vmatpush1.msra.mxu0 0.0
    %1185 = vmatprep.subr.mxu0 0.0
    %1186 = vmatpush1.msra.mxu0 0.0
    %1187 = vmatprep.subr.mxu0 0.0
    %1188 = vmatpush1.msra.mxu0 0.0
    %1189 = vmatprep.mubr.f32.mxu0 0.0
    %v1190 = vand.u32 %v111, 4294901760
    %v1191 = vsub.f32 %v111, %v1190
    %v1192 = vand.u32 %v1191, 4294901760
    %1193 = vmatmul.mubr.f32.gmra.mrb[0].mxu0 %v1192
    %v1194 = vpop.f32.mrb[0].mxu0
    %v1195 = vadd.f32 %v1105, %v1194
    %v1196 = vpop.f32.mrb[0].mxu0
    %v1197 = vadd.f32 %v1107, %v1196
    %1198 = vdwg.mxu0
    %v1199 = vand.u32 %v48, 4294901760
    %v1200 = vsub.f32 %v48, %v1199
    %v1201 = vand.u32 %v1200, 4294901760
    %1202 = vmatprep.subr.mxu0 %v1201
    %v1203 = vand.u32 %v47, 4294901760
    %v1204 = vsub.f32 %v47, %v1203
    %v1205 = vand.u32 %v1204, 4294901760
    %1206 = vmatpush1.msra.mxu0 %v1205
    %v1207 = vand.u32 %v56, 4294901760
    %v1208 = vsub.f32 %v56, %v1207
    %v1209 = vand.u32 %v1208, 4294901760
    %1210 = vmatprep.subr.mxu0 %v1209
    %v1211 = vand.u32 %v55, 4294901760
    %v1212 = vsub.f32 %v55, %v1211
    %v1213 = vand.u32 %v1212, 4294901760
    %1214 = vmatpush1.msra.mxu0 %v1213
    %v1215 = vand.u32 %v64, 4294901760
    %v1216 = vsub.f32 %v64, %v1215
    %v1217 = vand.u32 %v1216, 4294901760
    %1218 = vmatprep.subr.mxu0 %v1217
    %v1219 = vand.u32 %v63, 4294901760
    %v1220 = vsub.f32 %v63, %v1219
    %v1221 = vand.u32 %v1220, 4294901760
    %1222 = vmatpush1.msra.mxu0 %v1221
    %v1223 = vand.u32 %v72, 4294901760
    %v1224 = vsub.f32 %v72, %v1223
    %v1225 = vand.u32 %v1224, 4294901760
    %1226 = vmatprep.subr.mxu0 %v1225
    %v1227 = vand.u32 %v71, 4294901760
    %v1228 = vsub.f32 %v71, %v1227
    %v1229 = vand.u32 %v1228, 4294901760
    %1230 = vmatpush1.msra.mxu0 %v1229
    %v1231 = vand.u32 %v80, 4294901760
    %v1232 = vsub.f32 %v80, %v1231
    %v1233 = vand.u32 %v1232, 4294901760
    %1234 = vmatprep.subr.mxu0 %v1233
    %v1235 = vand.u32 %v79, 4294901760
    %v1236 = vsub.f32 %v79, %v1235
    %v1237 = vand.u32 %v1236, 4294901760
    %1238 = vmatpush1.msra.mxu0 %v1237
    %v1239 = vand.u32 %v88, 4294901760
    %v1240 = vsub.f32 %v88, %v1239
    %v1241 = vand.u32 %v1240, 4294901760
    %1242 = vmatprep.subr.mxu0 %v1241
    %v1243 = vand.u32 %v87, 4294901760
    %v1244 = vsub.f32 %v87, %v1243
    %v1245 = vand.u32 %v1244, 4294901760
    %1246 = vmatpush1.msra.mxu0 %v1245
    %v1247 = vand.u32 %v96, 4294901760
    %v1248 = vsub.f32 %v96, %v1247
    %v1249 = vand.u32 %v1248, 4294901760
    %1250 = vmatprep.subr.mxu0 %v1249
    %v1251 = vand.u32 %v95, 4294901760
    %v1252 = vsub.f32 %v95, %v1251
    %v1253 = vand.u32 %v1252, 4294901760
    %1254 = vmatpush1.msra.mxu0 %v1253
    %v1255 = vand.u32 %v104, 4294901760
    %v1256 = vsub.f32 %v104, %v1255
    %v1257 = vand.u32 %v1256, 4294901760
    %1258 = vmatprep.subr.mxu0 %v1257
    %v1259 = vand.u32 %v103, 4294901760
    %v1260 = vsub.f32 %v103, %v1259
    %v1261 = vand.u32 %v1260, 4294901760
    %1262 = vmatpush1.msra.mxu0 %v1261
    %1263 = vmatprep.subr.mxu0 0.0
    %1264 = vmatpush1.msra.mxu0 0.0
    %1265 = vmatprep.subr.mxu0 0.0
    %1266 = vmatpush1.msra.mxu0 0.0
    %1267 = vmatprep.subr.mxu0 0.0
    %1268 = vmatpush1.msra.mxu0 0.0
    %1269 = vmatprep.subr.mxu0 0.0
    %1270 = vmatpush1.msra.mxu0 0.0
    %1271 = vmatprep.subr.mxu0 0.0
    %1272 = vmatpush1.msra.mxu0 0.0
    %1273 = vmatprep.subr.mxu0 0.0
    %1274 = vmatpush1.msra.mxu0 0.0
    %1275 = vmatprep.subr.mxu0 0.0
    %1276 = vmatpush1.msra.mxu0 0.0
    %1277 = vmatprep.subr.mxu0 0.0
    %1278 = vmatpush1.msra.mxu0 0.0
    %1279 = vmatprep.subr.mxu0 0.0
    %1280 = vmatpush1.msra.mxu0 0.0
    %1281 = vmatprep.subr.mxu0 0.0
    %1282 = vmatpush1.msra.mxu0 0.0
    %1283 = vmatprep.subr.mxu0 0.0
    %1284 = vmatpush1.msra.mxu0 0.0
    %1285 = vmatprep.subr.mxu0 0.0
    %1286 = vmatpush1.msra.mxu0 0.0
    %1287 = vmatprep.subr.mxu0 0.0
    %1288 = vmatpush1.msra.mxu0 0.0
    %1289 = vmatprep.subr.mxu0 0.0
    %1290 = vmatpush1.msra.mxu0 0.0
    %1291 = vmatprep.subr.mxu0 0.0
    %1292 = vmatpush1.msra.mxu0 0.0
    %1293 = vmatprep.subr.mxu0 0.0
    %1294 = vmatpush1.msra.mxu0 0.0
    %1295 = vmatprep.subr.mxu0 0.0
    %1296 = vmatpush1.msra.mxu0 0.0
    %1297 = vmatprep.subr.mxu0 0.0
    %1298 = vmatpush1.msra.mxu0 0.0
    %1299 = vmatprep.subr.mxu0 0.0
    %1300 = vmatpush1.msra.mxu0 0.0
    %1301 = vmatprep.subr.mxu0 0.0
    %1302 = vmatpush1.msra.mxu0 0.0
    %1303 = vmatprep.subr.mxu0 0.0
    %1304 = vmatpush1.msra.mxu0 0.0
    %1305 = vmatprep.subr.mxu0 0.0
    %1306 = vmatpush1.msra.mxu0 0.0
    %1307 = vmatprep.subr.mxu0 0.0
    %1308 = vmatpush1.msra.mxu0 0.0
    %1309 = vmatprep.subr.mxu0 0.0
    %1310 = vmatpush1.msra.mxu0 0.0
    %1311 = vmatprep.mubr.f32.mxu0 0.0
    %v1312 = vand.u32 %v111, 4294901760
    %1313 = vmatmul.mubr.f32.gmra.mrb[0].mxu0 %v1312
    %v1314 = vpop.f32.mrb[0].mxu0
    %v1315 = vadd.f32 %v1195, %v1314
    %v1316 = vpop.f32.mrb[0].mxu0
    %v1317 = vadd.f32 %v1197, %v1316
    %1318 = vdwg.mxu0
    %v1319 = vand.u32 %v48, 4294901760
    %1320 = vmatprep.subr.mxu0 %v1319
    %v1321 = vand.u32 %v47, 4294901760
    %1322 = vmatpush1.msra.mxu0 %v1321
    %v1323 = vand.u32 %v56, 4294901760
    %1324 = vmatprep.subr.mxu0 %v1323
    %v1325 = vand.u32 %v55, 4294901760
    %1326 = vmatpush1.msra.mxu0 %v1325
    %v1327 = vand.u32 %v64, 4294901760
    %1328 = vmatprep.subr.mxu0 %v1327
    %v1329 = vand.u32 %v63, 4294901760
    %1330 = vmatpush1.msra.mxu0 %v1329
    %v1331 = vand.u32 %v72, 4294901760
    %1332 = vmatprep.subr.mxu0 %v1331
    %v1333 = vand.u32 %v71, 4294901760
    %1334 = vmatpush1.msra.mxu0 %v1333
    %v1335 = vand.u32 %v80, 4294901760
    %1336 = vmatprep.subr.mxu0 %v1335
    %v1337 = vand.u32 %v79, 4294901760
    %1338 = vmatpush1.msra.mxu0 %v1337
    %v1339 = vand.u32 %v88, 4294901760
    %1340 = vmatprep.subr.mxu0 %v1339
    %v1341 = vand.u32 %v87, 4294901760
    %1342 = vmatpush1.msra.mxu0 %v1341
    %v1343 = vand.u32 %v96, 4294901760
    %1344 = vmatprep.subr.mxu0 %v1343
    %v1345 = vand.u32 %v95, 4294901760
    %1346 = vmatpush1.msra.mxu0 %v1345
    %v1347 = vand.u32 %v104, 4294901760
    %1348 = vmatprep.subr.mxu0 %v1347
    %v1349 = vand.u32 %v103, 4294901760
    %1350 = vmatpush1.msra.mxu0 %v1349
    %1351 = vmatprep.subr.mxu0 0.0
    %1352 = vmatpush1.msra.mxu0 0.0
    %1353 = vmatprep.subr.mxu0 0.0
    %1354 = vmatpush1.msra.mxu0 0.0
    %1355 = vmatprep.subr.mxu0 0.0
    %1356 = vmatpush1.msra.mxu0 0.0
    %1357 = vmatprep.subr.mxu0 0.0
    %1358 = vmatpush1.msra.mxu0 0.0
    %1359 = vmatprep.subr.mxu0 0.0
    %1360 = vmatpush1.msra.mxu0 0.0
    %1361 = vmatprep.subr.mxu0 0.0
    %1362 = vmatpush1.msra.mxu0 0.0
    %1363 = vmatprep.subr.mxu0 0.0
    %1364 = vmatpush1.msra.mxu0 0.0
    %1365 = vmatprep.subr.mxu0 0.0
    %1366 = vmatpush1.msra.mxu0 0.0
    %1367 = vmatprep.subr.mxu0 0.0
    %1368 = vmatpush1.msra.mxu0 0.0
    %1369 = vmatprep.subr.mxu0 0.0
    %1370 = vmatpush1.msra.mxu0 0.0
    %1371 = vmatprep.subr.mxu0 0.0
    %1372 = vmatpush1.msra.mxu0 0.0
    %1373 = vmatprep.subr.mxu0 0.0
    %1374 = vmatpush1.msra.mxu0 0.0
    %1375 = vmatprep.subr.mxu0 0.0
    %1376 = vmatpush1.msra.mxu0 0.0
    %1377 = vmatprep.subr.mxu0 0.0
    %1378 = vmatpush1.msra.mxu0 0.0
    %1379 = vmatprep.subr.mxu0 0.0
    %1380 = vmatpush1.msra.mxu0 0.0
    %1381 = vmatprep.subr.mxu0 0.0
    %1382 = vmatpush1.msra.mxu0 0.0
    %1383 = vmatprep.subr.mxu0 0.0
    %1384 = vmatpush1.msra.mxu0 0.0
    %1385 = vmatprep.subr.mxu0 0.0
    %1386 = vmatpush1.msra.mxu0 0.0
    %1387 = vmatprep.subr.mxu0 0.0
    %1388 = vmatpush1.msra.mxu0 0.0
    %1389 = vmatprep.subr.mxu0 0.0
    %1390 = vmatpush1.msra.mxu0 0.0
    %1391 = vmatprep.subr.mxu0 0.0
    %1392 = vmatpush1.msra.mxu0 0.0
    %1393 = vmatprep.subr.mxu0 0.0
    %1394 = vmatpush1.msra.mxu0 0.0
    %1395 = vmatprep.subr.mxu0 0.0
    %1396 = vmatpush1.msra.mxu0 0.0
    %1397 = vmatprep.subr.mxu0 0.0
    %1398 = vmatpush1.msra.mxu0 0.0
    %1399 = vmatprep.mubr.f32.mxu0 0.0
    %v1400 = vand.u32 %v111, 4294901760
    %1401 = vmatmul.mubr.f32.gmra.mrb[0].mxu0 %v1400
    %v1402 = vpop.f32.mrb[0].mxu0
    %v1403 = vadd.f32 %v1315, %v1402
    %v1404 = vpop.f32.mrb[0].mxu0
    %v1405 = vadd.f32 %v1317, %v1404
    %1406 = vdwg.mxu0
    %v1407 = vand.u32 %v50, 4294901760
    %1408 = vmatprep.subr.mxu0 %v1407
    %v1409 = vand.u32 %v49, 4294901760
    %1410 = vmatpush1.msra.mxu0 %v1409
    %v1411 = vand.u32 %v58, 4294901760
    %1412 = vmatprep.subr.mxu0 %v1411
    %v1413 = vand.u32 %v57, 4294901760
    %1414 = vmatpush1.msra.mxu0 %v1413
    %v1415 = vand.u32 %v66, 4294901760
    %1416 = vmatprep.subr.mxu0 %v1415
    %v1417 = vand.u32 %v65, 4294901760
    %1418 = vmatpush1.msra.mxu0 %v1417
    %v1419 = vand.u32 %v74, 4294901760
    %1420 = vmatprep.subr.mxu0 %v1419
    %v1421 = vand.u32 %v73, 4294901760
    %1422 = vmatpush1.msra.mxu0 %v1421
    %v1423 = vand.u32 %v82, 4294901760
    %1424 = vmatprep.subr.mxu0 %v1423
    %v1425 = vand.u32 %v81, 4294901760
    %1426 = vmatpush1.msra.mxu0 %v1425
    %v1427 = vand.u32 %v90, 4294901760
    %1428 = vmatprep.subr.mxu0 %v1427
    %v1429 = vand.u32 %v89, 4294901760
    %1430 = vmatpush1.msra.mxu0 %v1429
    %v1431 = vand.u32 %v98, 4294901760
    %1432 = vmatprep.subr.mxu0 %v1431
    %v1433 = vand.u32 %v97, 4294901760
    %1434 = vmatpush1.msra.mxu0 %v1433
    %v1435 = vand.u32 %v106, 4294901760
    %1436 = vmatprep.subr.mxu0 %v1435
    %v1437 = vand.u32 %v105, 4294901760
    %1438 = vmatpush1.msra.mxu0 %v1437
    %1439 = vmatprep.subr.mxu0 0.0
    %1440 = vmatpush1.msra.mxu0 0.0
    %1441 = vmatprep.subr.mxu0 0.0
    %1442 = vmatpush1.msra.mxu0 0.0
    %1443 = vmatprep.subr.mxu0 0.0
    %1444 = vmatpush1.msra.mxu0 0.0
    %1445 = vmatprep.subr.mxu0 0.0
    %1446 = vmatpush1.msra.mxu0 0.0
    %1447 = vmatprep.subr.mxu0 0.0
    %1448 = vmatpush1.msra.mxu0 0.0
    %1449 = vmatprep.subr.mxu0 0.0
    %1450 = vmatpush1.msra.mxu0 0.0
    %1451 = vmatprep.subr.mxu0 0.0
    %1452 = vmatpush1.msra.mxu0 0.0
    %1453 = vmatprep.subr.mxu0 0.0
    %1454 = vmatpush1.msra.mxu0 0.0
    %1455 = vmatprep.subr.mxu0 0.0
    %1456 = vmatpush1.msra.mxu0 0.0
    %1457 = vmatprep.subr.mxu0 0.0
    %1458 = vmatpush1.msra.mxu0 0.0
    %1459 = vmatprep.subr.mxu0 0.0
    %1460 = vmatpush1.msra.mxu0 0.0
    %1461 = vmatprep.subr.mxu0 0.0
    %1462 = vmatpush1.msra.mxu0 0.0
    %1463 = vmatprep.subr.mxu0 0.0
    %1464 = vmatpush1.msra.mxu0 0.0
    %1465 = vmatprep.subr.mxu0 0.0
    %1466 = vmatpush1.msra.mxu0 0.0
    %1467 = vmatprep.subr.mxu0 0.0
    %1468 = vmatpush1.msra.mxu0 0.0
    %1469 = vmatprep.subr.mxu0 0.0
    %1470 = vmatpush1.msra.mxu0 0.0
    %1471 = vmatprep.subr.mxu0 0.0
    %1472 = vmatpush1.msra.mxu0 0.0
    %1473 = vmatprep.subr.mxu0 0.0
    %1474 = vmatpush1.msra.mxu0 0.0
    %1475 = vmatprep.subr.mxu0 0.0
    %1476 = vmatpush1.msra.mxu0 0.0
    %1477 = vmatprep.subr.mxu0 0.0
    %1478 = vmatpush1.msra.mxu0 0.0
    %1479 = vmatprep.subr.mxu0 0.0
    %1480 = vmatpush1.msra.mxu0 0.0
    %1481 = vmatprep.subr.mxu0 0.0
    %1482 = vmatpush1.msra.mxu0 0.0
    %1483 = vmatprep.subr.mxu0 0.0
    %1484 = vmatpush1.msra.mxu0 0.0
    %1485 = vmatprep.subr.mxu0 0.0
    %1486 = vmatpush1.msra.mxu0 0.0
    %1487 = vmatprep.mubr.f32.mxu0 0.0
    %v1488 = vand.u32 %v111, 4294901760
    %v1489 = vsub.f32 %v111, %v1488
    %v1490 = vand.u32 %v1489, 4294901760
    %v1491 = vsub.f32 %v1489, %v1490
    %v1492 = vand.u32 %v1491, 4294901760
    %1493 = vmatmul.mubr.f32.gmra.mrb[0].mxu0 %v1492
    %v1494 = vpop.f32.mrb[0].mxu0
    %v1495 = vadd.f32 0.0, %v1494
    %v1496 = vpop.f32.mrb[0].mxu0
    %v1497 = vadd.f32 0.0, %v1496
    %1498 = vdwg.mxu0
    %v1499 = vand.u32 %v50, 4294901760
    %v1500 = vsub.f32 %v50, %v1499
    %v1501 = vand.u32 %v1500, 4294901760
    %v1502 = vsub.f32 %v1500, %v1501
    %v1503 = vand.u32 %v1502, 4294901760
    %1504 = vmatprep.subr.mxu0 %v1503
    %v1505 = vand.u32 %v49, 4294901760
    %v1506 = vsub.f32 %v49, %v1505
    %v1507 = vand.u32 %v1506, 4294901760
    %v1508 = vsub.f32 %v1506, %v1507
    %v1509 = vand.u32 %v1508, 4294901760
    %1510 = vmatpush1.msra.mxu0 %v1509
    %v1511 = vand.u32 %v58, 4294901760
    %v1512 = vsub.f32 %v58, %v1511
    %v1513 = vand.u32 %v1512, 4294901760
    %v1514 = vsub.f32 %v1512, %v1513
    %v1515 = vand.u32 %v1514, 4294901760
    %1516 = vmatprep.subr.mxu0 %v1515
    %v1517 = vand.u32 %v57, 4294901760
    %v1518 = vsub.f32 %v57, %v1517
    %v1519 = vand.u32 %v1518, 4294901760
    %v1520 = vsub.f32 %v1518, %v1519
    %v1521 = vand.u32 %v1520, 4294901760
    %1522 = vmatpush1.msra.mxu0 %v1521
    %v1523 = vand.u32 %v66, 4294901760
    %v1524 = vsub.f32 %v66, %v1523
    %v1525 = vand.u32 %v1524, 4294901760
    %v1526 = vsub.f32 %v1524, %v1525
    %v1527 = vand.u32 %v1526, 4294901760
    %1528 = vmatprep.subr.mxu0 %v1527
    %v1529 = vand.u32 %v65, 4294901760
    %v1530 = vsub.f32 %v65, %v1529
    %v1531 = vand.u32 %v1530, 4294901760
    %v1532 = vsub.f32 %v1530, %v1531
    %v1533 = vand.u32 %v1532, 4294901760
    %1534 = vmatpush1.msra.mxu0 %v1533
    %v1535 = vand.u32 %v74, 4294901760
    %v1536 = vsub.f32 %v74, %v1535
    %v1537 = vand.u32 %v1536, 4294901760
    %v1538 = vsub.f32 %v1536, %v1537
    %v1539 = vand.u32 %v1538, 4294901760
    %1540 = vmatprep.subr.mxu0 %v1539
    %v1541 = vand.u32 %v73, 4294901760
    %v1542 = vsub.f32 %v73, %v1541
    %v1543 = vand.u32 %v1542, 4294901760
    %v1544 = vsub.f32 %v1542, %v1543
    %v1545 = vand.u32 %v1544, 4294901760
    %1546 = vmatpush1.msra.mxu0 %v1545
    %v1547 = vand.u32 %v82, 4294901760
    %v1548 = vsub.f32 %v82, %v1547
    %v1549 = vand.u32 %v1548, 4294901760
    %v1550 = vsub.f32 %v1548, %v1549
    %v1551 = vand.u32 %v1550, 4294901760
    %1552 = vmatprep.subr.mxu0 %v1551
    %v1553 = vand.u32 %v81, 4294901760
    %v1554 = vsub.f32 %v81, %v1553
    %v1555 = vand.u32 %v1554, 4294901760
    %v1556 = vsub.f32 %v1554, %v1555
    %v1557 = vand.u32 %v1556, 4294901760
    %1558 = vmatpush1.msra.mxu0 %v1557
    %v1559 = vand.u32 %v90, 4294901760
    %v1560 = vsub.f32 %v90, %v1559
    %v1561 = vand.u32 %v1560, 4294901760
    %v1562 = vsub.f32 %v1560, %v1561
    %v1563 = vand.u32 %v1562, 4294901760
    %1564 = vmatprep.subr.mxu0 %v1563
    %v1565 = vand.u32 %v89, 4294901760
    %v1566 = vsub.f32 %v89, %v1565
    %v1567 = vand.u32 %v1566, 4294901760
    %v1568 = vsub.f32 %v1566, %v1567
    %v1569 = vand.u32 %v1568, 4294901760
    %1570 = vmatpush1.msra.mxu0 %v1569
    %v1571 = vand.u32 %v98, 4294901760
    %v1572 = vsub.f32 %v98, %v1571
    %v1573 = vand.u32 %v1572, 4294901760
    %v1574 = vsub.f32 %v1572, %v1573
    %v1575 = vand.u32 %v1574, 4294901760
    %1576 = vmatprep.subr.mxu0 %v1575
    %v1577 = vand.u32 %v97, 4294901760
    %v1578 = vsub.f32 %v97, %v1577
    %v1579 = vand.u32 %v1578, 4294901760
    %v1580 = vsub.f32 %v1578, %v1579
    %v1581 = vand.u32 %v1580, 4294901760
    %1582 = vmatpush1.msra.mxu0 %v1581
    %v1583 = vand.u32 %v106, 4294901760
    %v1584 = vsub.f32 %v106, %v1583
    %v1585 = vand.u32 %v1584, 4294901760
    %v1586 = vsub.f32 %v1584, %v1585
    %v1587 = vand.u32 %v1586, 4294901760
    %1588 = vmatprep.subr.mxu0 %v1587
    %v1589 = vand.u32 %v105, 4294901760
    %v1590 = vsub.f32 %v105, %v1589
    %v1591 = vand.u32 %v1590, 4294901760
    %v1592 = vsub.f32 %v1590, %v1591
    %v1593 = vand.u32 %v1592, 4294901760
    %1594 = vmatpush1.msra.mxu0 %v1593
    %1595 = vmatprep.subr.mxu0 0.0
    %1596 = vmatpush1.msra.mxu0 0.0
    %1597 = vmatprep.subr.mxu0 0.0
    %1598 = vmatpush1.msra.mxu0 0.0
    %1599 = vmatprep.subr.mxu0 0.0
    %1600 = vmatpush1.msra.mxu0 0.0
    %1601 = vmatprep.subr.mxu0 0.0
    %1602 = vmatpush1.msra.mxu0 0.0
    %1603 = vmatprep.subr.mxu0 0.0
    %1604 = vmatpush1.msra.mxu0 0.0
    %1605 = vmatprep.subr.mxu0 0.0
    %1606 = vmatpush1.msra.mxu0 0.0
    %1607 = vmatprep.subr.mxu0 0.0
    %1608 = vmatpush1.msra.mxu0 0.0
    %1609 = vmatprep.subr.mxu0 0.0
    %1610 = vmatpush1.msra.mxu0 0.0
    %1611 = vmatprep.subr.mxu0 0.0
    %1612 = vmatpush1.msra.mxu0 0.0
    %1613 = vmatprep.subr.mxu0 0.0
    %1614 = vmatpush1.msra.mxu0 0.0
    %1615 = vmatprep.subr.mxu0 0.0
    %1616 = vmatpush1.msra.mxu0 0.0
    %1617 = vmatprep.subr.mxu0 0.0
    %1618 = vmatpush1.msra.mxu0 0.0
    %1619 = vmatprep.subr.mxu0 0.0
    %1620 = vmatpush1.msra.mxu0 0.0
    %1621 = vmatprep.subr.mxu0 0.0
    %1622 = vmatpush1.msra.mxu0 0.0
    %1623 = vmatprep.subr.mxu0 0.0
    %1624 = vmatpush1.msra.mxu0 0.0
    %1625 = vmatprep.subr.mxu0 0.0
    %1626 = vmatpush1.msra.mxu0 0.0
    %1627 = vmatprep.subr.mxu0 0.0
    %1628 = vmatpush1.msra.mxu0 0.0
    %1629 = vmatprep.subr.mxu0 0.0
    %1630 = vmatpush1.msra.mxu0 0.0
    %1631 = vmatprep.subr.mxu0 0.0
    %1632 = vmatpush1.msra.mxu0 0.0
    %1633 = vmatprep.subr.mxu0 0.0
    %1634 = vmatpush1.msra.mxu0 0.0
    %1635 = vmatprep.subr.mxu0 0.0
    %1636 = vmatpush1.msra.mxu0 0.0
    %1637 = vmatprep.subr.mxu0 0.0
    %1638 = vmatpush1.msra.mxu0 0.0
    %1639 = vmatprep.subr.mxu0 0.0
    %1640 = vmatpush1.msra.mxu0 0.0
    %1641 = vmatprep.subr.mxu0 0.0
    %1642 = vmatpush1.msra.mxu0 0.0
    %1643 = vmatprep.mubr.f32.mxu0 0.0
    %v1644 = vand.u32 %v111, 4294901760
    %1645 = vmatmul.mubr.f32.gmra.mrb[0].mxu0 %v1644
    %v1646 = vpop.f32.mrb[0].mxu0
    %v1647 = vadd.f32 %v1495, %v1646
    %v1648 = vpop.f32.mrb[0].mxu0
    %v1649 = vadd.f32 %v1497, %v1648
    %1650 = vdwg.mxu0
    %v1651 = vand.u32 %v50, 4294901760
    %v1652 = vsub.f32 %v50, %v1651
    %1653 = vmatprep.subr.mxu0 %v1652
    %v1654 = vand.u32 %v49, 4294901760
    %v1655 = vsub.f32 %v49, %v1654
    %1656 = vmatpush1.msra.mxu0 %v1655
    %v1657 = vand.u32 %v58, 4294901760
    %v1658 = vsub.f32 %v58, %v1657
    %1659 = vmatprep.subr.mxu0 %v1658
    %v1660 = vand.u32 %v57, 4294901760
    %v1661 = vsub.f32 %v57, %v1660
    %1662 = vmatpush1.msra.mxu0 %v1661
    %v1663 = vand.u32 %v66, 4294901760
    %v1664 = vsub.f32 %v66, %v1663
    %1665 = vmatprep.subr.mxu0 %v1664
    %v1666 = vand.u32 %v65, 4294901760
    %v1667 = vsub.f32 %v65, %v1666
    %1668 = vmatpush1.msra.mxu0 %v1667
    %v1669 = vand.u32 %v74, 4294901760
    %v1670 = vsub.f32 %v74, %v1669
    %1671 = vmatprep.subr.mxu0 %v1670
    %v1672 = vand.u32 %v73, 4294901760
    %v1673 = vsub.f32 %v73, %v1672
    %1674 = vmatpush1.msra.mxu0 %v1673
    %v1675 = vand.u32 %v82, 4294901760
    %v1676 = vsub.f32 %v82, %v1675
    %1677 = vmatprep.subr.mxu0 %v1676
    %v1678 = vand.u32 %v81, 4294901760
    %v1679 = vsub.f32 %v81, %v1678
    %1680 = vmatpush1.msra.mxu0 %v1679
    %v1681 = vand.u32 %v90, 4294901760
    %v1682 = vsub.f32 %v90, %v1681
    %1683 = vmatprep.subr.mxu0 %v1682
    %v1684 = vand.u32 %v89, 4294901760
    %v1685 = vsub.f32 %v89, %v1684
    %1686 = vmatpush1.msra.mxu0 %v1685
    %v1687 = vand.u32 %v98, 4294901760
    %v1688 = vsub.f32 %v98, %v1687
    %1689 = vmatprep.subr.mxu0 %v1688
    %v1690 = vand.u32 %v97, 4294901760
    %v1691 = vsub.f32 %v97, %v1690
    %1692 = vmatpush1.msra.mxu0 %v1691
    %v1693 = vand.u32 %v106, 4294901760
    %v1694 = vsub.f32 %v106, %v1693
    %1695 = vmatprep.subr.mxu0 %v1694
    %v1696 = vand.u32 %v105, 4294901760
    %v1697 = vsub.f32 %v105, %v1696
    %1698 = vmatpush1.msra.mxu0 %v1697
    %1699 = vmatprep.subr.mxu0 0.0
    %1700 = vmatpush1.msra.mxu0 0.0
    %1701 = vmatprep.subr.mxu0 0.0
    %1702 = vmatpush1.msra.mxu0 0.0
    %1703 = vmatprep.subr.mxu0 0.0
    %1704 = vmatpush1.msra.mxu0 0.0
    %1705 = vmatprep.subr.mxu0 0.0
    %1706 = vmatpush1.msra.mxu0 0.0
    %1707 = vmatprep.subr.mxu0 0.0
    %1708 = vmatpush1.msra.mxu0 0.0
    %1709 = vmatprep.subr.mxu0 0.0
    %1710 = vmatpush1.msra.mxu0 0.0
    %1711 = vmatprep.subr.mxu0 0.0
    %1712 = vmatpush1.msra.mxu0 0.0
    %1713 = vmatprep.subr.mxu0 0.0
    %1714 = vmatpush1.msra.mxu0 0.0
    %1715 = vmatprep.subr.mxu0 0.0
    %1716 = vmatpush1.msra.mxu0 0.0
    %1717 = vmatprep.subr.mxu0 0.0
    %1718 = vmatpush1.msra.mxu0 0.0
    %1719 = vmatprep.subr.mxu0 0.0
    %1720 = vmatpush1.msra.mxu0 0.0
    %1721 = vmatprep.subr.mxu0 0.0
    %1722 = vmatpush1.msra.mxu0 0.0
    %1723 = vmatprep.subr.mxu0 0.0
    %1724 = vmatpush1.msra.mxu0 0.0
    %1725 = vmatprep.subr.mxu0 0.0
    %1726 = vmatpush1.msra.mxu0 0.0
    %1727 = vmatprep.subr.mxu0 0.0
    %1728 = vmatpush1.msra.mxu0 0.0
    %1729 = vmatprep.subr.mxu0 0.0
    %1730 = vmatpush1.msra.mxu0 0.0
    %1731 = vmatprep.subr.mxu0 0.0
    %1732 = vmatpush1.msra.mxu0 0.0
    %1733 = vmatprep.subr.mxu0 0.0
    %1734 = vmatpush1.msra.mxu0 0.0
    %1735 = vmatprep.subr.mxu0 0.0
    %1736 = vmatpush1.msra.mxu0 0.0
    %1737 = vmatprep.subr.mxu0 0.0
    %1738 = vmatpush1.msra.mxu0 0.0
    %1739 = vmatprep.subr.mxu0 0.0
    %1740 = vmatpush1.msra.mxu0 0.0
    %1741 = vmatprep.subr.mxu0 0.0
    %1742 = vmatpush1.msra.mxu0 0.0
    %1743 = vmatprep.subr.mxu0 0.0
    %1744 = vmatpush1.msra.mxu0 0.0
    %1745 = vmatprep.subr.mxu0 0.0
    %1746 = vmatpush1.msra.mxu0 0.0
    %1747 = vmatprep.mubr.f32.mxu0 0.0
    %v1748 = vand.u32 %v111, 4294901760
    %v1749 = vsub.f32 %v111, %v1748
    %1750 = vmatmul.mubr.f32.gmra.mrb[0].mxu0 %v1749
    %v1751 = vpop.f32.mrb[0].mxu0
    %v1752 = vadd.f32 %v1647, %v1751
    %v1753 = vpop.f32.mrb[0].mxu0
    %v1754 = vadd.f32 %v1649, %v1753
    %1755 = vdwg.mxu0
    %v1756 = vand.u32 %v50, 4294901760
    %1757 = vmatprep.subr.mxu0 %v1756
    %v1758 = vand.u32 %v49, 4294901760
    %1759 = vmatpush1.msra.mxu0 %v1758
    %v1760 = vand.u32 %v58, 4294901760
    %1761 = vmatprep.subr.mxu0 %v1760
    %v1762 = vand.u32 %v57, 4294901760
    %1763 = vmatpush1.msra.mxu0 %v1762
    %v1764 = vand.u32 %v66, 4294901760
    %1765 = vmatprep.subr.mxu0 %v1764
    %v1766 = vand.u32 %v65, 4294901760
    %1767 = vmatpush1.msra.mxu0 %v1766
    %v1768 = vand.u32 %v74, 4294901760
    %1769 = vmatprep.subr.mxu0 %v1768
    %v1770 = vand.u32 %v73, 4294901760
    %1771 = vmatpush1.msra.mxu0 %v1770
    %v1772 = vand.u32 %v82, 4294901760
    %1773 = vmatprep.subr.mxu0 %v1772
    %v1774 = vand.u32 %v81, 4294901760
    %1775 = vmatpush1.msra.mxu0 %v1774
    %v1776 = vand.u32 %v90, 4294901760
    %1777 = vmatprep.subr.mxu0 %v1776
    %v1778 = vand.u32 %v89, 4294901760
    %1779 = vmatpush1.msra.mxu0 %v1778
    %v1780 = vand.u32 %v98, 4294901760
    %1781 = vmatprep.subr.mxu0 %v1780
    %v1782 = vand.u32 %v97, 4294901760
    %1783 = vmatpush1.msra.mxu0 %v1782
    %v1784 = vand.u32 %v106, 4294901760
    %1785 = vmatprep.subr.mxu0 %v1784
    %v1786 = vand.u32 %v105, 4294901760
    %1787 = vmatpush1.msra.mxu0 %v1786
    %1788 = vmatprep.subr.mxu0 0.0
    %1789 = vmatpush1.msra.mxu0 0.0
    %1790 = vmatprep.subr.mxu0 0.0
    %1791 = vmatpush1.msra.mxu0 0.0
    %1792 = vmatprep.subr.mxu0 0.0
    %1793 = vmatpush1.msra.mxu0 0.0
    %1794 = vmatprep.subr.mxu0 0.0
    %1795 = vmatpush1.msra.mxu0 0.0
    %1796 = vmatprep.subr.mxu0 0.0
    %1797 = vmatpush1.msra.mxu0 0.0
    %1798 = vmatprep.subr.mxu0 0.0
    %1799 = vmatpush1.msra.mxu0 0.0
    %1800 = vmatprep.subr.mxu0 0.0
    %1801 = vmatpush1.msra.mxu0 0.0
    %1802 = vmatprep.subr.mxu0 0.0
    %1803 = vmatpush1.msra.mxu0 0.0
    %1804 = vmatprep.subr.mxu0 0.0
    %1805 = vmatpush1.msra.mxu0 0.0
    %1806 = vmatprep.subr.mxu0 0.0
    %1807 = vmatpush1.msra.mxu0 0.0
    %1808 = vmatprep.subr.mxu0 0.0
    %1809 = vmatpush1.msra.mxu0 0.0
    %1810 = vmatprep.subr.mxu0 0.0
    %1811 = vmatpush1.msra.mxu0 0.0
    %1812 = vmatprep.subr.mxu0 0.0
    %1813 = vmatpush1.msra.mxu0 0.0
    %1814 = vmatprep.subr.mxu0 0.0
    %1815 = vmatpush1.msra.mxu0 0.0
    %1816 = vmatprep.subr.mxu0 0.0
    %1817 = vmatpush1.msra.mxu0 0.0
    %1818 = vmatprep.subr.mxu0 0.0
    %1819 = vmatpush1.msra.mxu0 0.0
    %1820 = vmatprep.subr.mxu0 0.0
    %1821 = vmatpush1.msra.mxu0 0.0
    %1822 = vmatprep.subr.mxu0 0.0
    %1823 = vmatpush1.msra.mxu0 0.0
    %1824 = vmatprep.subr.mxu0 0.0
    %1825 = vmatpush1.msra.mxu0 0.0
    %1826 = vmatprep.subr.mxu0 0.0
    %1827 = vmatpush1.msra.mxu0 0.0
    %1828 = vmatprep.subr.mxu0 0.0
    %1829 = vmatpush1.msra.mxu0 0.0
    %1830 = vmatprep.subr.mxu0 0.0
    %1831 = vmatpush1.msra.mxu0 0.0
    %1832 = vmatprep.subr.mxu0 0.0
    %1833 = vmatpush1.msra.mxu0 0.0
    %1834 = vmatprep.subr.mxu0 0.0
    %1835 = vmatpush1.msra.mxu0 0.0
    %1836 = vmatprep.mubr.f32.mxu0 0.0
    %v1837 = vand.u32 %v111, 4294901760
    %v1838 = vsub.f32 %v111, %v1837
    %v1839 = vand.u32 %v1838, 4294901760
    %1840 = vmatmul.mubr.f32.gmra.mrb[0].mxu0 %v1839
    %v1841 = vpop.f32.mrb[0].mxu0
    %v1842 = vadd.f32 %v1752, %v1841
    %v1843 = vpop.f32.mrb[0].mxu0
    %v1844 = vadd.f32 %v1754, %v1843
    %1845 = vdwg.mxu0
    %v1846 = vand.u32 %v50, 4294901760
    %v1847 = vsub.f32 %v50, %v1846
    %v1848 = vand.u32 %v1847, 4294901760
    %1849 = vmatprep.subr.mxu0 %v1848
    %v1850 = vand.u32 %v49, 4294901760
    %v1851 = vsub.f32 %v49, %v1850
    %v1852 = vand.u32 %v1851, 4294901760
    %1853 = vmatpush1.msra.mxu0 %v1852
    %v1854 = vand.u32 %v58, 4294901760
    %v1855 = vsub.f32 %v58, %v1854
    %v1856 = vand.u32 %v1855, 4294901760
    %1857 = vmatprep.subr.mxu0 %v1856
    %v1858 = vand.u32 %v57, 4294901760
    %v1859 = vsub.f32 %v57, %v1858
    %v1860 = vand.u32 %v1859, 4294901760
    %1861 = vmatpush1.msra.mxu0 %v1860
    %v1862 = vand.u32 %v66, 4294901760
    %v1863 = vsub.f32 %v66, %v1862
    %v1864 = vand.u32 %v1863, 4294901760
    %1865 = vmatprep.subr.mxu0 %v1864
    %v1866 = vand.u32 %v65, 4294901760
    %v1867 = vsub.f32 %v65, %v1866
    %v1868 = vand.u32 %v1867, 4294901760
    %1869 = vmatpush1.msra.mxu0 %v1868
    %v1870 = vand.u32 %v74, 4294901760
    %v1871 = vsub.f32 %v74, %v1870
    %v1872 = vand.u32 %v1871, 4294901760
    %1873 = vmatprep.subr.mxu0 %v1872
    %v1874 = vand.u32 %v73, 4294901760
    %v1875 = vsub.f32 %v73, %v1874
    %v1876 = vand.u32 %v1875, 4294901760
    %1877 = vmatpush1.msra.mxu0 %v1876
    %v1878 = vand.u32 %v82, 4294901760
    %v1879 = vsub.f32 %v82, %v1878
    %v1880 = vand.u32 %v1879, 4294901760
    %1881 = vmatprep.subr.mxu0 %v1880
    %v1882 = vand.u32 %v81, 4294901760
    %v1883 = vsub.f32 %v81, %v1882
    %v1884 = vand.u32 %v1883, 4294901760
    %1885 = vmatpush1.msra.mxu0 %v1884
    %v1886 = vand.u32 %v90, 4294901760
    %v1887 = vsub.f32 %v90, %v1886
    %v1888 = vand.u32 %v1887, 4294901760
    %1889 = vmatprep.subr.mxu0 %v1888
    %v1890 = vand.u32 %v89, 4294901760
    %v1891 = vsub.f32 %v89, %v1890
    %v1892 = vand.u32 %v1891, 4294901760
    %1893 = vmatpush1.msra.mxu0 %v1892
    %v1894 = vand.u32 %v98, 4294901760
    %v1895 = vsub.f32 %v98, %v1894
    %v1896 = vand.u32 %v1895, 4294901760
    %1897 = vmatprep.subr.mxu0 %v1896
    %v1898 = vand.u32 %v97, 4294901760
    %v1899 = vsub.f32 %v97, %v1898
    %v1900 = vand.u32 %v1899, 4294901760
    %1901 = vmatpush1.msra.mxu0 %v1900
    %v1902 = vand.u32 %v106, 4294901760
    %v1903 = vsub.f32 %v106, %v1902
    %v1904 = vand.u32 %v1903, 4294901760
    %1905 = vmatprep.subr.mxu0 %v1904
    %v1906 = vand.u32 %v105, 4294901760
    %v1907 = vsub.f32 %v105, %v1906
    %v1908 = vand.u32 %v1907, 4294901760
    %1909 = vmatpush1.msra.mxu0 %v1908
    %1910 = vmatprep.subr.mxu0 0.0
    %1911 = vmatpush1.msra.mxu0 0.0
    %1912 = vmatprep.subr.mxu0 0.0
    %1913 = vmatpush1.msra.mxu0 0.0
    %1914 = vmatprep.subr.mxu0 0.0
    %1915 = vmatpush1.msra.mxu0 0.0
    %1916 = vmatprep.subr.mxu0 0.0
    %1917 = vmatpush1.msra.mxu0 0.0
    %1918 = vmatprep.subr.mxu0 0.0
    %1919 = vmatpush1.msra.mxu0 0.0
    %1920 = vmatprep.subr.mxu0 0.0
    %1921 = vmatpush1.msra.mxu0 0.0
    %1922 = vmatprep.subr.mxu0 0.0
    %1923 = vmatpush1.msra.mxu0 0.0
    %1924 = vmatprep.subr.mxu0 0.0
    %1925 = vmatpush1.msra.mxu0 0.0
    %1926 = vmatprep.subr.mxu0 0.0
    %1927 = vmatpush1.msra.mxu0 0.0
    %1928 = vmatprep.subr.mxu0 0.0
    %1929 = vmatpush1.msra.mxu0 0.0
    %1930 = vmatprep.subr.mxu0 0.0
    %1931 = vmatpush1.msra.mxu0 0.0
    %1932 = vmatprep.subr.mxu0 0.0
    %1933 = vmatpush1.msra.mxu0 0.0
    %1934 = vmatprep.subr.mxu0 0.0
    %1935 = vmatpush1.msra.mxu0 0.0
    %1936 = vmatprep.subr.mxu0 0.0
    %1937 = vmatpush1.msra.mxu0 0.0
    %1938 = vmatprep.subr.mxu0 0.0
    %1939 = vmatpush1.msra.mxu0 0.0
    %1940 = vmatprep.subr.mxu0 0.0
    %1941 = vmatpush1.msra.mxu0 0.0
    %1942 = vmatprep.subr.mxu0 0.0
    %1943 = vmatpush1.msra.mxu0 0.0
    %1944 = vmatprep.subr.mxu0 0.0
    %1945 = vmatpush1.msra.mxu0 0.0
    %1946 = vmatprep.subr.mxu0 0.0
    %1947 = vmatpush1.msra.mxu0 0.0
    %1948 = vmatprep.subr.mxu0 0.0
    %1949 = vmatpush1.msra.mxu0 0.0
    %1950 = vmatprep.subr.mxu0 0.0
    %1951 = vmatpush1.msra.mxu0 0.0
    %1952 = vmatprep.subr.mxu0 0.0
    %1953 = vmatpush1.msra.mxu0 0.0
    %1954 = vmatprep.subr.mxu0 0.0
    %1955 = vmatpush1.msra.mxu0 0.0
    %1956 = vmatprep.subr.mxu0 0.0
    %1957 = vmatpush1.msra.mxu0 0.0
    %1958 = vmatprep.mubr.f32.mxu0 0.0
    %v1959 = vand.u32 %v111, 4294901760
    %1960 = vmatmul.mubr.f32.gmra.mrb[0].mxu0 %v1959
    %v1961 = vpop.f32.mrb[0].mxu0
    %v1962 = vadd.f32 %v1842, %v1961
    %v1963 = vpop.f32.mrb[0].mxu0
    %v1964 = vadd.f32 %v1844, %v1963
    %1965 = vdwg.mxu0
    %v1966 = vand.u32 %v50, 4294901760
    %1967 = vmatprep.subr.mxu0 %v1966
    %v1968 = vand.u32 %v49, 4294901760
    %1969 = vmatpush1.msra.mxu0 %v1968
    %v1970 = vand.u32 %v58, 4294901760
    %1971 = vmatprep.subr.mxu0 %v1970
    %v1972 = vand.u32 %v57, 4294901760
    %1973 = vmatpush1.msra.mxu0 %v1972
    %v1974 = vand.u32 %v66, 4294901760
    %1975 = vmatprep.subr.mxu0 %v1974
    %v1976 = vand.u32 %v65, 4294901760
    %1977 = vmatpush1.msra.mxu0 %v1976
    %v1978 = vand.u32 %v74, 4294901760
    %1979 = vmatprep.subr.mxu0 %v1978
    %v1980 = vand.u32 %v73, 4294901760
    %1981 = vmatpush1.msra.mxu0 %v1980
    %v1982 = vand.u32 %v82, 4294901760
    %1983 = vmatprep.subr.mxu0 %v1982
    %v1984 = vand.u32 %v81, 4294901760
    %1985 = vmatpush1.msra.mxu0 %v1984
    %v1986 = vand.u32 %v90, 4294901760
    %1987 = vmatprep.subr.mxu0 %v1986
    %v1988 = vand.u32 %v89, 4294901760
    %1989 = vmatpush1.msra.mxu0 %v1988
    %v1990 = vand.u32 %v98, 4294901760
    %1991 = vmatprep.subr.mxu0 %v1990
    %v1992 = vand.u32 %v97, 4294901760
    %1993 = vmatpush1.msra.mxu0 %v1992
    %v1994 = vand.u32 %v106, 4294901760
    %1995 = vmatprep.subr.mxu0 %v1994
    %v1996 = vand.u32 %v105, 4294901760
    %1997 = vmatpush1.msra.mxu0 %v1996
    %1998 = vmatprep.subr.mxu0 0.0
    %1999 = vmatpush1.msra.mxu0 0.0
    %2000 = vmatprep.subr.mxu0 0.0
    %2001 = vmatpush1.msra.mxu0 0.0
    %2002 = vmatprep.subr.mxu0 0.0
    %2003 = vmatpush1.msra.mxu0 0.0
    %2004 = vmatprep.subr.mxu0 0.0
    %2005 = vmatpush1.msra.mxu0 0.0
    %2006 = vmatprep.subr.mxu0 0.0
    %2007 = vmatpush1.msra.mxu0 0.0
    %2008 = vmatprep.subr.mxu0 0.0
    %2009 = vmatpush1.msra.mxu0 0.0
    %2010 = vmatprep.subr.mxu0 0.0
    %2011 = vmatpush1.msra.mxu0 0.0
    %2012 = vmatprep.subr.mxu0 0.0
    %2013 = vmatpush1.msra.mxu0 0.0
    %2014 = vmatprep.subr.mxu0 0.0
    %2015 = vmatpush1.msra.mxu0 0.0
    %2016 = vmatprep.subr.mxu0 0.0
    %2017 = vmatpush1.msra.mxu0 0.0
    %2018 = vmatprep.subr.mxu0 0.0
    %2019 = vmatpush1.msra.mxu0 0.0
    %2020 = vmatprep.subr.mxu0 0.0
    %2021 = vmatpush1.msra.mxu0 0.0
    %2022 = vmatprep.subr.mxu0 0.0
    %2023 = vmatpush1.msra.mxu0 0.0
    %2024 = vmatprep.subr.mxu0 0.0
    %2025 = vmatpush1.msra.mxu0 0.0
    %2026 = vmatprep.subr.mxu0 0.0
    %2027 = vmatpush1.msra.mxu0 0.0
    %2028 = vmatprep.subr.mxu0 0.0
    %2029 = vmatpush1.msra.mxu0 0.0
    %2030 = vmatprep.subr.mxu0 0.0
    %2031 = vmatpush1.msra.mxu0 0.0
    %2032 = vmatprep.subr.mxu0 0.0
    %2033 = vmatpush1.msra.mxu0 0.0
    %2034 = vmatprep.subr.mxu0 0.0
    %2035 = vmatpush1.msra.mxu0 0.0
    %2036 = vmatprep.subr.mxu0 0.0
    %2037 = vmatpush1.msra.mxu0 0.0
    %2038 = vmatprep.subr.mxu0 0.0
    %2039 = vmatpush1.msra.mxu0 0.0
    %2040 = vmatprep.subr.mxu0 0.0
    %2041 = vmatpush1.msra.mxu0 0.0
    %2042 = vmatprep.subr.mxu0 0.0
    %2043 = vmatpush1.msra.mxu0 0.0
    %2044 = vmatprep.subr.mxu0 0.0
    %2045 = vmatpush1.msra.mxu0 0.0
    %2046 = vmatprep.mubr.f32.mxu0 0.0
    %v2047 = vand.u32 %v111, 4294901760
    %2048 = vmatmul.mubr.f32.gmra.mrb[0].mxu0 %v2047
    %v2049 = vpop.f32.mrb[0].mxu0
    %v2050 = vadd.f32 %v1962, %v2049
    %v2051 = vpop.f32.mrb[0].mxu0
    %v2052 = vadd.f32 %v1964, %v2051
    %2053 = vdwg.mxu0
    %v2054 = vand.u32 %v52, 4294901760
    %2055 = vmatprep.subr.mxu0 %v2054
    %v2056 = vand.u32 %v51, 4294901760
    %2057 = vmatpush1.msra.mxu0 %v2056
    %v2058 = vand.u32 %v60, 4294901760
    %2059 = vmatprep.subr.mxu0 %v2058
    %v2060 = vand.u32 %v59, 4294901760
    %2061 = vmatpush1.msra.mxu0 %v2060
    %v2062 = vand.u32 %v68, 4294901760
    %2063 = vmatprep.subr.mxu0 %v2062
    %v2064 = vand.u32 %v67, 4294901760
    %2065 = vmatpush1.msra.mxu0 %v2064
    %v2066 = vand.u32 %v76, 4294901760
    %2067 = vmatprep.subr.mxu0 %v2066
    %v2068 = vand.u32 %v75, 4294901760
    %2069 = vmatpush1.msra.mxu0 %v2068
    %v2070 = vand.u32 %v84, 4294901760
    %2071 = vmatprep.subr.mxu0 %v2070
    %v2072 = vand.u32 %v83, 4294901760
    %2073 = vmatpush1.msra.mxu0 %v2072
    %v2074 = vand.u32 %v92, 4294901760
    %2075 = vmatprep.subr.mxu0 %v2074
    %v2076 = vand.u32 %v91, 4294901760
    %2077 = vmatpush1.msra.mxu0 %v2076
    %v2078 = vand.u32 %v100, 4294901760
    %2079 = vmatprep.subr.mxu0 %v2078
    %v2080 = vand.u32 %v99, 4294901760
    %2081 = vmatpush1.msra.mxu0 %v2080
    %v2082 = vand.u32 %v108, 4294901760
    %2083 = vmatprep.subr.mxu0 %v2082
    %v2084 = vand.u32 %v107, 4294901760
    %2085 = vmatpush1.msra.mxu0 %v2084
    %2086 = vmatprep.subr.mxu0 0.0
    %2087 = vmatpush1.msra.mxu0 0.0
    %2088 = vmatprep.subr.mxu0 0.0
    %2089 = vmatpush1.msra.mxu0 0.0
    %2090 = vmatprep.subr.mxu0 0.0
    %2091 = vmatpush1.msra.mxu0 0.0
    %2092 = vmatprep.subr.mxu0 0.0
    %2093 = vmatpush1.msra.mxu0 0.0
    %2094 = vmatprep.subr.mxu0 0.0
    %2095 = vmatpush1.msra.mxu0 0.0
    %2096 = vmatprep.subr.mxu0 0.0
    %2097 = vmatpush1.msra.mxu0 0.0
    %2098 = vmatprep.subr.mxu0 0.0
    %2099 = vmatpush1.msra.mxu0 0.0
    %2100 = vmatprep.subr.mxu0 0.0
    %2101 = vmatpush1.msra.mxu0 0.0
    %2102 = vmatprep.subr.mxu0 0.0
    %2103 = vmatpush1.msra.mxu0 0.0
    %2104 = vmatprep.subr.mxu0 0.0
    %2105 = vmatpush1.msra.mxu0 0.0
    %2106 = vmatprep.subr.mxu0 0.0
    %2107 = vmatpush1.msra.mxu0 0.0
    %2108 = vmatprep.subr.mxu0 0.0
    %2109 = vmatpush1.msra.mxu0 0.0
    %2110 = vmatprep.subr.mxu0 0.0
    %2111 = vmatpush1.msra.mxu0 0.0
    %2112 = vmatprep.subr.mxu0 0.0
    %2113 = vmatpush1.msra.mxu0 0.0
    %2114 = vmatprep.subr.mxu0 0.0
    %2115 = vmatpush1.msra.mxu0 0.0
    %2116 = vmatprep.subr.mxu0 0.0
    %2117 = vmatpush1.msra.mxu0 0.0
    %2118 = vmatprep.subr.mxu0 0.0
    %2119 = vmatpush1.msra.mxu0 0.0
    %2120 = vmatprep.subr.mxu0 0.0
    %2121 = vmatpush1.msra.mxu0 0.0
    %2122 = vmatprep.subr.mxu0 0.0
    %2123 = vmatpush1.msra.mxu0 0.0
    %2124 = vmatprep.subr.mxu0 0.0
    %2125 = vmatpush1.msra.mxu0 0.0
    %2126 = vmatprep.subr.mxu0 0.0
    %2127 = vmatpush1.msra.mxu0 0.0
    %2128 = vmatprep.subr.mxu0 0.0
    %2129 = vmatpush1.msra.mxu0 0.0
    %2130 = vmatprep.subr.mxu0 0.0
    %2131 = vmatpush1.msra.mxu0 0.0
    %2132 = vmatprep.subr.mxu0 0.0
    %2133 = vmatpush1.msra.mxu0 0.0
    %2134 = vmatprep.mubr.f32.mxu0 0.0
    %v2135 = vand.u32 %v111, 4294901760
    %v2136 = vsub.f32 %v111, %v2135
    %v2137 = vand.u32 %v2136, 4294901760
    %v2138 = vsub.f32 %v2136, %v2137
    %v2139 = vand.u32 %v2138, 4294901760
    %2140 = vmatmul.mubr.f32.gmra.mrb[0].mxu0 %v2139
    %v2141 = vpop.f32.mrb[0].mxu0
    %v2142 = vadd.f32 0.0, %v2141
    %v2143 = vpop.f32.mrb[0].mxu0
    %v2144 = vadd.f32 0.0, %v2143
    %2145 = vdwg.mxu0
    %v2146 = vand.u32 %v52, 4294901760
    %v2147 = vsub.f32 %v52, %v2146
    %v2148 = vand.u32 %v2147, 4294901760
    %v2149 = vsub.f32 %v2147, %v2148
    %v2150 = vand.u32 %v2149, 4294901760
    %2151 = vmatprep.subr.mxu0 %v2150
    %v2152 = vand.u32 %v51, 4294901760
    %v2153 = vsub.f32 %v51, %v2152
    %v2154 = vand.u32 %v2153, 4294901760
    %v2155 = vsub.f32 %v2153, %v2154
    %v2156 = vand.u32 %v2155, 4294901760
    %2157 = vmatpush1.msra.mxu0 %v2156
    %v2158 = vand.u32 %v60, 4294901760
    %v2159 = vsub.f32 %v60, %v2158
    %v2160 = vand.u32 %v2159, 4294901760
    %v2161 = vsub.f32 %v2159, %v2160
    %v2162 = vand.u32 %v2161, 4294901760
    %2163 = vmatprep.subr.mxu0 %v2162
    %v2164 = vand.u32 %v59, 4294901760
    %v2165 = vsub.f32 %v59, %v2164
    %v2166 = vand.u32 %v2165, 4294901760
    %v2167 = vsub.f32 %v2165, %v2166
    %v2168 = vand.u32 %v2167, 4294901760
    %2169 = vmatpush1.msra.mxu0 %v2168
    %v2170 = vand.u32 %v68, 4294901760
    %v2171 = vsub.f32 %v68, %v2170
    %v2172 = vand.u32 %v2171, 4294901760
    %v2173 = vsub.f32 %v2171, %v2172
    %v2174 = vand.u32 %v2173, 4294901760
    %2175 = vmatprep.subr.mxu0 %v2174
    %v2176 = vand.u32 %v67, 4294901760
    %v2177 = vsub.f32 %v67, %v2176
    %v2178 = vand.u32 %v2177, 4294901760
    %v2179 = vsub.f32 %v2177, %v2178
    %v2180 = vand.u32 %v2179, 4294901760
    %2181 = vmatpush1.msra.mxu0 %v2180
    %v2182 = vand.u32 %v76, 4294901760
    %v2183 = vsub.f32 %v76, %v2182
    %v2184 = vand.u32 %v2183, 4294901760
    %v2185 = vsub.f32 %v2183, %v2184
    %v2186 = vand.u32 %v2185, 4294901760
    %2187 = vmatprep.subr.mxu0 %v2186
    %v2188 = vand.u32 %v75, 4294901760
    %v2189 = vsub.f32 %v75, %v2188
    %v2190 = vand.u32 %v2189, 4294901760
    %v2191 = vsub.f32 %v2189, %v2190
    %v2192 = vand.u32 %v2191, 4294901760
    %2193 = vmatpush1.msra.mxu0 %v2192
    %v2194 = vand.u32 %v84, 4294901760
    %v2195 = vsub.f32 %v84, %v2194
    %v2196 = vand.u32 %v2195, 4294901760
    %v2197 = vsub.f32 %v2195, %v2196
    %v2198 = vand.u32 %v2197, 4294901760
    %2199 = vmatprep.subr.mxu0 %v2198
    %v2200 = vand.u32 %v83, 4294901760
    %v2201 = vsub.f32 %v83, %v2200
    %v2202 = vand.u32 %v2201, 4294901760
    %v2203 = vsub.f32 %v2201, %v2202
    %v2204 = vand.u32 %v2203, 4294901760
    %2205 = vmatpush1.msra.mxu0 %v2204
    %v2206 = vand.u32 %v92, 4294901760
    %v2207 = vsub.f32 %v92, %v2206
    %v2208 = vand.u32 %v2207, 4294901760
    %v2209 = vsub.f32 %v2207, %v2208
    %v2210 = vand.u32 %v2209, 4294901760
    %2211 = vmatprep.subr.mxu0 %v2210
    %v2212 = vand.u32 %v91, 4294901760
    %v2213 = vsub.f32 %v91, %v2212
    %v2214 = vand.u32 %v2213, 4294901760
    %v2215 = vsub.f32 %v2213, %v2214
    %v2216 = vand.u32 %v2215, 4294901760
    %2217 = vmatpush1.msra.mxu0 %v2216
    %v2218 = vand.u32 %v100, 4294901760
    %v2219 = vsub.f32 %v100, %v2218
    %v2220 = vand.u32 %v2219, 4294901760
    %v2221 = vsub.f32 %v2219, %v2220
    %v2222 = vand.u32 %v2221, 4294901760
    %2223 = vmatprep.subr.mxu0 %v2222
    %v2224 = vand.u32 %v99, 4294901760
    %v2225 = vsub.f32 %v99, %v2224
    %v2226 = vand.u32 %v2225, 4294901760
    %v2227 = vsub.f32 %v2225, %v2226
    %v2228 = vand.u32 %v2227, 4294901760
    %2229 = vmatpush1.msra.mxu0 %v2228
    %v2230 = vand.u32 %v108, 4294901760
    %v2231 = vsub.f32 %v108, %v2230
    %v2232 = vand.u32 %v2231, 4294901760
    %v2233 = vsub.f32 %v2231, %v2232
    %v2234 = vand.u32 %v2233, 4294901760
    %2235 = vmatprep.subr.mxu0 %v2234
    %v2236 = vand.u32 %v107, 4294901760
    %v2237 = vsub.f32 %v107, %v2236
    %v2238 = vand.u32 %v2237, 4294901760
    %v2239 = vsub.f32 %v2237, %v2238
    %v2240 = vand.u32 %v2239, 4294901760
    %2241 = vmatpush1.msra.mxu0 %v2240
    %2242 = vmatprep.subr.mxu0 0.0
    %2243 = vmatpush1.msra.mxu0 0.0
    %2244 = vmatprep.subr.mxu0 0.0
    %2245 = vmatpush1.msra.mxu0 0.0
    %2246 = vmatprep.subr.mxu0 0.0
    %2247 = vmatpush1.msra.mxu0 0.0
    %2248 = vmatprep.subr.mxu0 0.0
    %2249 = vmatpush1.msra.mxu0 0.0
    %2250 = vmatprep.subr.mxu0 0.0
    %2251 = vmatpush1.msra.mxu0 0.0
    %2252 = vmatprep.subr.mxu0 0.0
    %2253 = vmatpush1.msra.mxu0 0.0
    %2254 = vmatprep.subr.mxu0 0.0
    %2255 = vmatpush1.msra.mxu0 0.0
    %2256 = vmatprep.subr.mxu0 0.0
    %2257 = vmatpush1.msra.mxu0 0.0
    %2258 = vmatprep.subr.mxu0 0.0
    %2259 = vmatpush1.msra.mxu0 0.0
    %2260 = vmatprep.subr.mxu0 0.0
    %2261 = vmatpush1.msra.mxu0 0.0
    %2262 = vmatprep.subr.mxu0 0.0
    %2263 = vmatpush1.msra.mxu0 0.0
    %2264 = vmatprep.subr.mxu0 0.0
    %2265 = vmatpush1.msra.mxu0 0.0
    %2266 = vmatprep.subr.mxu0 0.0
    %2267 = vmatpush1.msra.mxu0 0.0
    %2268 = vmatprep.subr.mxu0 0.0
    %2269 = vmatpush1.msra.mxu0 0.0
    %2270 = vmatprep.subr.mxu0 0.0
    %2271 = vmatpush1.msra.mxu0 0.0
    %2272 = vmatprep.subr.mxu0 0.0
    %2273 = vmatpush1.msra.mxu0 0.0
    %2274 = vmatprep.subr.mxu0 0.0
    %2275 = vmatpush1.msra.mxu0 0.0
    %2276 = vmatprep.subr.mxu0 0.0
    %2277 = vmatpush1.msra.mxu0 0.0
    %2278 = vmatprep.subr.mxu0 0.0
    %2279 = vmatpush1.msra.mxu0 0.0
    %2280 = vmatprep.subr.mxu0 0.0
    %2281 = vmatpush1.msra.mxu0 0.0
    %2282 = vmatprep.subr.mxu0 0.0
    %2283 = vmatpush1.msra.mxu0 0.0
    %2284 = vmatprep.subr.mxu0 0.0
    %2285 = vmatpush1.msra.mxu0 0.0
    %2286 = vmatprep.subr.mxu0 0.0
    %2287 = vmatpush1.msra.mxu0 0.0
    %2288 = vmatprep.subr.mxu0 0.0
    %2289 = vmatpush1.msra.mxu0 0.0
    %2290 = vmatprep.mubr.f32.mxu0 0.0
    %v2291 = vand.u32 %v111, 4294901760
    %2292 = vmatmul.mubr.f32.gmra.mrb[0].mxu0 %v2291
    %v2293 = vpop.f32.mrb[0].mxu0
    %v2294 = vadd.f32 %v2142, %v2293
    %v2295 = vpop.f32.mrb[0].mxu0
    %v2296 = vadd.f32 %v2144, %v2295
    %2297 = vdwg.mxu0
    %v2298 = vand.u32 %v52, 4294901760
    %v2299 = vsub.f32 %v52, %v2298
    %2300 = vmatprep.subr.mxu0 %v2299
    %v2301 = vand.u32 %v51, 4294901760
    %v2302 = vsub.f32 %v51, %v2301
    %2303 = vmatpush1.msra.mxu0 %v2302
    %v2304 = vand.u32 %v60, 4294901760
    %v2305 = vsub.f32 %v60, %v2304
    %2306 = vmatprep.subr.mxu0 %v2305
    %v2307 = vand.u32 %v59, 4294901760
    %v2308 = vsub.f32 %v59, %v2307
    %2309 = vmatpush1.msra.mxu0 %v2308
    %v2310 = vand.u32 %v68, 4294901760
    %v2311 = vsub.f32 %v68, %v2310
    %2312 = vmatprep.subr.mxu0 %v2311
    %v2313 = vand.u32 %v67, 4294901760
    %v2314 = vsub.f32 %v67, %v2313
    %2315 = vmatpush1.msra.mxu0 %v2314
    %v2316 = vand.u32 %v76, 4294901760
    %v2317 = vsub.f32 %v76, %v2316
    %2318 = vmatprep.subr.mxu0 %v2317
    %v2319 = vand.u32 %v75, 4294901760
    %v2320 = vsub.f32 %v75, %v2319
    %2321 = vmatpush1.msra.mxu0 %v2320
    %v2322 = vand.u32 %v84, 4294901760
    %v2323 = vsub.f32 %v84, %v2322
    %2324 = vmatprep.subr.mxu0 %v2323
    %v2325 = vand.u32 %v83, 4294901760
    %v2326 = vsub.f32 %v83, %v2325
    %2327 = vmatpush1.msra.mxu0 %v2326
    %v2328 = vand.u32 %v92, 4294901760
    %v2329 = vsub.f32 %v92, %v2328
    %2330 = vmatprep.subr.mxu0 %v2329
    %v2331 = vand.u32 %v91, 4294901760
    %v2332 = vsub.f32 %v91, %v2331
    %2333 = vmatpush1.msra.mxu0 %v2332
    %v2334 = vand.u32 %v100, 4294901760
    %v2335 = vsub.f32 %v100, %v2334
    %2336 = vmatprep.subr.mxu0 %v2335
    %v2337 = vand.u32 %v99, 4294901760
    %v2338 = vsub.f32 %v99, %v2337
    %2339 = vmatpush1.msra.mxu0 %v2338
    %v2340 = vand.u32 %v108, 4294901760
    %v2341 = vsub.f32 %v108, %v2340
    %2342 = vmatprep.subr.mxu0 %v2341
    %v2343 = vand.u32 %v107, 4294901760
    %v2344 = vsub.f32 %v107, %v2343
    %2345 = vmatpush1.msra.mxu0 %v2344
    %2346 = vmatprep.subr.mxu0 0.0
    %2347 = vmatpush1.msra.mxu0 0.0
    %2348 = vmatprep.subr.mxu0 0.0
    %2349 = vmatpush1.msra.mxu0 0.0
    %2350 = vmatprep.subr.mxu0 0.0
    %2351 = vmatpush1.msra.mxu0 0.0
    %2352 = vmatprep.subr.mxu0 0.0
    %2353 = vmatpush1.msra.mxu0 0.0
    %2354 = vmatprep.subr.mxu0 0.0
    %2355 = vmatpush1.msra.mxu0 0.0
    %2356 = vmatprep.subr.mxu0 0.0
    %2357 = vmatpush1.msra.mxu0 0.0
    %2358 = vmatprep.subr.mxu0 0.0
    %2359 = vmatpush1.msra.mxu0 0.0
    %2360 = vmatprep.subr.mxu0 0.0
    %2361 = vmatpush1.msra.mxu0 0.0
    %2362 = vmatprep.subr.mxu0 0.0
    %2363 = vmatpush1.msra.mxu0 0.0
    %2364 = vmatprep.subr.mxu0 0.0
    %2365 = vmatpush1.msra.mxu0 0.0
    %2366 = vmatprep.subr.mxu0 0.0
    %2367 = vmatpush1.msra.mxu0 0.0
    %2368 = vmatprep.subr.mxu0 0.0
    %2369 = vmatpush1.msra.mxu0 0.0
    %2370 = vmatprep.subr.mxu0 0.0
    %2371 = vmatpush1.msra.mxu0 0.0
    %2372 = vmatprep.subr.mxu0 0.0
    %2373 = vmatpush1.msra.mxu0 0.0
    %2374 = vmatprep.subr.mxu0 0.0
    %2375 = vmatpush1.msra.mxu0 0.0
    %2376 = vmatprep.subr.mxu0 0.0
    %2377 = vmatpush1.msra.mxu0 0.0
    %2378 = vmatprep.subr.mxu0 0.0
    %2379 = vmatpush1.msra.mxu0 0.0
    %2380 = vmatprep.subr.mxu0 0.0
    %2381 = vmatpush1.msra.mxu0 0.0
    %2382 = vmatprep.subr.mxu0 0.0
    %2383 = vmatpush1.msra.mxu0 0.0
    %2384 = vmatprep.subr.mxu0 0.0
    %2385 = vmatpush1.msra.mxu0 0.0
    %2386 = vmatprep.subr.mxu0 0.0
    %2387 = vmatpush1.msra.mxu0 0.0
    %2388 = vmatprep.subr.mxu0 0.0
    %2389 = vmatpush1.msra.mxu0 0.0
    %2390 = vmatprep.subr.mxu0 0.0
    %2391 = vmatpush1.msra.mxu0 0.0
    %2392 = vmatprep.subr.mxu0 0.0
    %2393 = vmatpush1.msra.mxu0 0.0
    %2394 = vmatprep.mubr.f32.mxu0 0.0
    %v2395 = vand.u32 %v111, 4294901760
    %v2396 = vsub.f32 %v111, %v2395
    %2397 = vmatmul.mubr.f32.gmra.mrb[0].mxu0 %v2396
    %v2398 = vpop.f32.mrb[0].mxu0
    %v2399 = vadd.f32 %v2294, %v2398
    %v2400 = vpop.f32.mrb[0].mxu0
    %v2401 = vadd.f32 %v2296, %v2400
    %2402 = vdwg.mxu0
    %v2403 = vand.u32 %v52, 4294901760
    %2404 = vmatprep.subr.mxu0 %v2403
    %v2405 = vand.u32 %v51, 4294901760
    %2406 = vmatpush1.msra.mxu0 %v2405
    %v2407 = vand.u32 %v60, 4294901760
    %2408 = vmatprep.subr.mxu0 %v2407
    %v2409 = vand.u32 %v59, 4294901760
    %2410 = vmatpush1.msra.mxu0 %v2409
    %v2411 = vand.u32 %v68, 4294901760
    %2412 = vmatprep.subr.mxu0 %v2411
    %v2413 = vand.u32 %v67, 4294901760
    %2414 = vmatpush1.msra.mxu0 %v2413
    %v2415 = vand.u32 %v76, 4294901760
    %2416 = vmatprep.subr.mxu0 %v2415
    %v2417 = vand.u32 %v75, 4294901760
    %2418 = vmatpush1.msra.mxu0 %v2417
    %v2419 = vand.u32 %v84, 4294901760
    %2420 = vmatprep.subr.mxu0 %v2419
    %v2421 = vand.u32 %v83, 4294901760
    %2422 = vmatpush1.msra.mxu0 %v2421
    %v2423 = vand.u32 %v92, 4294901760
    %2424 = vmatprep.subr.mxu0 %v2423
    %v2425 = vand.u32 %v91, 4294901760
    %2426 = vmatpush1.msra.mxu0 %v2425
    %v2427 = vand.u32 %v100, 4294901760
    %2428 = vmatprep.subr.mxu0 %v2427
    %v2429 = vand.u32 %v99, 4294901760
    %2430 = vmatpush1.msra.mxu0 %v2429
    %v2431 = vand.u32 %v108, 4294901760
    %2432 = vmatprep.subr.mxu0 %v2431
    %v2433 = vand.u32 %v107, 4294901760
    %2434 = vmatpush1.msra.mxu0 %v2433
    %2435 = vmatprep.subr.mxu0 0.0
    %2436 = vmatpush1.msra.mxu0 0.0
    %2437 = vmatprep.subr.mxu0 0.0
    %2438 = vmatpush1.msra.mxu0 0.0
    %2439 = vmatprep.subr.mxu0 0.0
    %2440 = vmatpush1.msra.mxu0 0.0
    %2441 = vmatprep.subr.mxu0 0.0
    %2442 = vmatpush1.msra.mxu0 0.0
    %2443 = vmatprep.subr.mxu0 0.0
    %2444 = vmatpush1.msra.mxu0 0.0
    %2445 = vmatprep.subr.mxu0 0.0
    %2446 = vmatpush1.msra.mxu0 0.0
    %2447 = vmatprep.subr.mxu0 0.0
    %2448 = vmatpush1.msra.mxu0 0.0
    %2449 = vmatprep.subr.mxu0 0.0
    %2450 = vmatpush1.msra.mxu0 0.0
    %2451 = vmatprep.subr.mxu0 0.0
    %2452 = vmatpush1.msra.mxu0 0.0
    %2453 = vmatprep.subr.mxu0 0.0
    %2454 = vmatpush1.msra.mxu0 0.0
    %2455 = vmatprep.subr.mxu0 0.0
    %2456 = vmatpush1.msra.mxu0 0.0
    %2457 = vmatprep.subr.mxu0 0.0
    %2458 = vmatpush1.msra.mxu0 0.0
    %2459 = vmatprep.subr.mxu0 0.0
    %2460 = vmatpush1.msra.mxu0 0.0
    %2461 = vmatprep.subr.mxu0 0.0
    %2462 = vmatpush1.msra.mxu0 0.0
    %2463 = vmatprep.subr.mxu0 0.0
    %2464 = vmatpush1.msra.mxu0 0.0
    %2465 = vmatprep.subr.mxu0 0.0
    %2466 = vmatpush1.msra.mxu0 0.0
    %2467 = vmatprep.subr.mxu0 0.0
    %2468 = vmatpush1.msra.mxu0 0.0
    %2469 = vmatprep.subr.mxu0 0.0
    %2470 = vmatpush1.msra.mxu0 0.0
    %2471 = vmatprep.subr.mxu0 0.0
    %2472 = vmatpush1.msra.mxu0 0.0
    %2473 = vmatprep.subr.mxu0 0.0
    %2474 = vmatpush1.msra.mxu0 0.0
    %2475 = vmatprep.subr.mxu0 0.0
    %2476 = vmatpush1.msra.mxu0 0.0
    %2477 = vmatprep.subr.mxu0 0.0
    %2478 = vmatpush1.msra.mxu0 0.0
    %2479 = vmatprep.subr.mxu0 0.0
    %2480 = vmatpush1.msra.mxu0 0.0
    %2481 = vmatprep.subr.mxu0 0.0
    %2482 = vmatpush1.msra.mxu0 0.0
    %2483 = vmatprep.mubr.f32.mxu0 0.0
    %v2484 = vand.u32 %v111, 4294901760
    %v2485 = vsub.f32 %v111, %v2484
    %v2486 = vand.u32 %v2485, 4294901760
    %2487 = vmatmul.mubr.f32.gmra.mrb[0].mxu0 %v2486
    %v2488 = vpop.f32.mrb[0].mxu0
    %v2489 = vadd.f32 %v2399, %v2488
    %v2490 = vpop.f32.mrb[0].mxu0
    %v2491 = vadd.f32 %v2401, %v2490
    %2492 = vdwg.mxu0
    %v2493 = vand.u32 %v52, 4294901760
    %v2494 = vsub.f32 %v52, %v2493
    %v2495 = vand.u32 %v2494, 4294901760
    %2496 = vmatprep.subr.mxu0 %v2495
    %v2497 = vand.u32 %v51, 4294901760
    %v2498 = vsub.f32 %v51, %v2497
    %v2499 = vand.u32 %v2498, 4294901760
    %2500 = vmatpush1.msra.mxu0 %v2499
    %v2501 = vand.u32 %v60, 4294901760
    %v2502 = vsub.f32 %v60, %v2501
    %v2503 = vand.u32 %v2502, 4294901760
    %2504 = vmatprep.subr.mxu0 %v2503
    %v2505 = vand.u32 %v59, 4294901760
    %v2506 = vsub.f32 %v59, %v2505
    %v2507 = vand.u32 %v2506, 4294901760
    %2508 = vmatpush1.msra.mxu0 %v2507
    %v2509 = vand.u32 %v68, 4294901760
    %v2510 = vsub.f32 %v68, %v2509
    %v2511 = vand.u32 %v2510, 4294901760
    %2512 = vmatprep.subr.mxu0 %v2511
    %v2513 = vand.u32 %v67, 4294901760
    %v2514 = vsub.f32 %v67, %v2513
    %v2515 = vand.u32 %v2514, 4294901760
    %2516 = vmatpush1.msra.mxu0 %v2515
    %v2517 = vand.u32 %v76, 4294901760
    %v2518 = vsub.f32 %v76, %v2517
    %v2519 = vand.u32 %v2518, 4294901760
    %2520 = vmatprep.subr.mxu0 %v2519
    %v2521 = vand.u32 %v75, 4294901760
    %v2522 = vsub.f32 %v75, %v2521
    %v2523 = vand.u32 %v2522, 4294901760
    %2524 = vmatpush1.msra.mxu0 %v2523
    %v2525 = vand.u32 %v84, 4294901760
    %v2526 = vsub.f32 %v84, %v2525
    %v2527 = vand.u32 %v2526, 4294901760
    %2528 = vmatprep.subr.mxu0 %v2527
    %v2529 = vand.u32 %v83, 4294901760
    %v2530 = vsub.f32 %v83, %v2529
    %v2531 = vand.u32 %v2530, 4294901760
    %2532 = vmatpush1.msra.mxu0 %v2531
    %v2533 = vand.u32 %v92, 4294901760
    %v2534 = vsub.f32 %v92, %v2533
    %v2535 = vand.u32 %v2534, 4294901760
    %2536 = vmatprep.subr.mxu0 %v2535
    %v2537 = vand.u32 %v91, 4294901760
    %v2538 = vsub.f32 %v91, %v2537
    %v2539 = vand.u32 %v2538, 4294901760
    %2540 = vmatpush1.msra.mxu0 %v2539
    %v2541 = vand.u32 %v100, 4294901760
    %v2542 = vsub.f32 %v100, %v2541
    %v2543 = vand.u32 %v2542, 4294901760
    %2544 = vmatprep.subr.mxu0 %v2543
    %v2545 = vand.u32 %v99, 4294901760
    %v2546 = vsub.f32 %v99, %v2545
    %v2547 = vand.u32 %v2546, 4294901760
    %2548 = vmatpush1.msra.mxu0 %v2547
    %v2549 = vand.u32 %v108, 4294901760
    %v2550 = vsub.f32 %v108, %v2549
    %v2551 = vand.u32 %v2550, 4294901760
    %2552 = vmatprep.subr.mxu0 %v2551
    %v2553 = vand.u32 %v107, 4294901760
    %v2554 = vsub.f32 %v107, %v2553
    %v2555 = vand.u32 %v2554, 4294901760
    %2556 = vmatpush1.msra.mxu0 %v2555
    %2557 = vmatprep.subr.mxu0 0.0
    %2558 = vmatpush1.msra.mxu0 0.0
    %2559 = vmatprep.subr.mxu0 0.0
    %2560 = vmatpush1.msra.mxu0 0.0
    %2561 = vmatprep.subr.mxu0 0.0
    %2562 = vmatpush1.msra.mxu0 0.0
    %2563 = vmatprep.subr.mxu0 0.0
    %2564 = vmatpush1.msra.mxu0 0.0
    %2565 = vmatprep.subr.mxu0 0.0
    %2566 = vmatpush1.msra.mxu0 0.0
    %2567 = vmatprep.subr.mxu0 0.0
    %2568 = vmatpush1.msra.mxu0 0.0
    %2569 = vmatprep.subr.mxu0 0.0
    %2570 = vmatpush1.msra.mxu0 0.0
    %2571 = vmatprep.subr.mxu0 0.0
    %2572 = vmatpush1.msra.mxu0 0.0
    %2573 = vmatprep.subr.mxu0 0.0
    %2574 = vmatpush1.msra.mxu0 0.0
    %2575 = vmatprep.subr.mxu0 0.0
    %2576 = vmatpush1.msra.mxu0 0.0
    %2577 = vmatprep.subr.mxu0 0.0
    %2578 = vmatpush1.msra.mxu0 0.0
    %2579 = vmatprep.subr.mxu0 0.0
    %2580 = vmatpush1.msra.mxu0 0.0
    %2581 = vmatprep.subr.mxu0 0.0
    %2582 = vmatpush1.msra.mxu0 0.0
    %2583 = vmatprep.subr.mxu0 0.0
    %2584 = vmatpush1.msra.mxu0 0.0
    %2585 = vmatprep.subr.mxu0 0.0
    %2586 = vmatpush1.msra.mxu0 0.0
    %2587 = vmatprep.subr.mxu0 0.0
    %2588 = vmatpush1.msra.mxu0 0.0
    %2589 = vmatprep.subr.mxu0 0.0
    %2590 = vmatpush1.msra.mxu0 0.0
    %2591 = vmatprep.subr.mxu0 0.0
    %2592 = vmatpush1.msra.mxu0 0.0
    %2593 = vmatprep.subr.mxu0 0.0
    %2594 = vmatpush1.msra.mxu0 0.0
    %2595 = vmatprep.subr.mxu0 0.0
    %2596 = vmatpush1.msra.mxu0 0.0
    %2597 = vmatprep.subr.mxu0 0.0
    %2598 = vmatpush1.msra.mxu0 0.0
    %2599 = vmatprep.subr.mxu0 0.0
    %2600 = vmatpush1.msra.mxu0 0.0
    %2601 = vmatprep.subr.mxu0 0.0
    %2602 = vmatpush1.msra.mxu0 0.0
    %2603 = vmatprep.subr.mxu0 0.0
    %2604 = vmatpush1.msra.mxu0 0.0
    %2605 = vmatprep.mubr.f32.mxu0 0.0
    %v2606 = vand.u32 %v111, 4294901760
    %2607 = vmatmul.mubr.f32.gmra.mrb[0].mxu0 %v2606
    %v2608 = vpop.f32.mrb[0].mxu0
    %v2609 = vadd.f32 %v2489, %v2608
    %v2610 = vpop.f32.mrb[0].mxu0
    %v2611 = vadd.f32 %v2491, %v2610
    %2612 = vdwg.mxu0
    %v2613 = vand.u32 %v52, 4294901760
    %2614 = vmatprep.subr.mxu0 %v2613
    %v2615 = vand.u32 %v51, 4294901760
    %2616 = vmatpush1.msra.mxu0 %v2615
    %v2617 = vand.u32 %v60, 4294901760
    %2618 = vmatprep.subr.mxu0 %v2617
    %v2619 = vand.u32 %v59, 4294901760
    %2620 = vmatpush1.msra.mxu0 %v2619
    %v2621 = vand.u32 %v68, 4294901760
    %2622 = vmatprep.subr.mxu0 %v2621
    %v2623 = vand.u32 %v67, 4294901760
    %2624 = vmatpush1.msra.mxu0 %v2623
    %v2625 = vand.u32 %v76, 4294901760
    %2626 = vmatprep.subr.mxu0 %v2625
    %v2627 = vand.u32 %v75, 4294901760
    %2628 = vmatpush1.msra.mxu0 %v2627
    %v2629 = vand.u32 %v84, 4294901760
    %2630 = vmatprep.subr.mxu0 %v2629
    %v2631 = vand.u32 %v83, 4294901760
    %2632 = vmatpush1.msra.mxu0 %v2631
    %v2633 = vand.u32 %v92, 4294901760
    %2634 = vmatprep.subr.mxu0 %v2633
    %v2635 = vand.u32 %v91, 4294901760
    %2636 = vmatpush1.msra.mxu0 %v2635
    %v2637 = vand.u32 %v100, 4294901760
    %2638 = vmatprep.subr.mxu0 %v2637
    %v2639 = vand.u32 %v99, 4294901760
    %2640 = vmatpush1.msra.mxu0 %v2639
    %v2641 = vand.u32 %v108, 4294901760
    %2642 = vmatprep.subr.mxu0 %v2641
    %v2643 = vand.u32 %v107, 4294901760
    %2644 = vmatpush1.msra.mxu0 %v2643
    %2645 = vmatprep.subr.mxu0 0.0
    %2646 = vmatpush1.msra.mxu0 0.0
    %2647 = vmatprep.subr.mxu0 0.0
    %2648 = vmatpush1.msra.mxu0 0.0
    %2649 = vmatprep.subr.mxu0 0.0
    %2650 = vmatpush1.msra.mxu0 0.0
    %2651 = vmatprep.subr.mxu0 0.0
    %2652 = vmatpush1.msra.mxu0 0.0
    %2653 = vmatprep.subr.mxu0 0.0
    %2654 = vmatpush1.msra.mxu0 0.0
    %2655 = vmatprep.subr.mxu0 0.0
    %2656 = vmatpush1.msra.mxu0 0.0
    %2657 = vmatprep.subr.mxu0 0.0
    %2658 = vmatpush1.msra.mxu0 0.0
    %2659 = vmatprep.subr.mxu0 0.0
    %2660 = vmatpush1.msra.mxu0 0.0
    %2661 = vmatprep.subr.mxu0 0.0
    %2662 = vmatpush1.msra.mxu0 0.0
    %2663 = vmatprep.subr.mxu0 0.0
    %2664 = vmatpush1.msra.mxu0 0.0
    %2665 = vmatprep.subr.mxu0 0.0
    %2666 = vmatpush1.msra.mxu0 0.0
    %2667 = vmatprep.subr.mxu0 0.0
    %2668 = vmatpush1.msra.mxu0 0.0
    %2669 = vmatprep.subr.mxu0 0.0
    %2670 = vmatpush1.msra.mxu0 0.0
    %2671 = vmatprep.subr.mxu0 0.0
    %2672 = vmatpush1.msra.mxu0 0.0
    %2673 = vmatprep.subr.mxu0 0.0
    %2674 = vmatpush1.msra.mxu0 0.0
    %2675 = vmatprep.subr.mxu0 0.0
    %2676 = vmatpush1.msra.mxu0 0.0
    %2677 = vmatprep.subr.mxu0 0.0
    %2678 = vmatpush1.msra.mxu0 0.0
    %2679 = vmatprep.subr.mxu0 0.0
    %2680 = vmatpush1.msra.mxu0 0.0
    %2681 = vmatprep.subr.mxu0 0.0
    %2682 = vmatpush1.msra.mxu0 0.0
    %2683 = vmatprep.subr.mxu0 0.0
    %2684 = vmatpush1.msra.mxu0 0.0
    %2685 = vmatprep.subr.mxu0 0.0
    %2686 = vmatpush1.msra.mxu0 0.0
    %2687 = vmatprep.subr.mxu0 0.0
    %2688 = vmatpush1.msra.mxu0 0.0
    %2689 = vmatprep.subr.mxu0 0.0
    %2690 = vmatpush1.msra.mxu0 0.0
    %2691 = vmatprep.subr.mxu0 0.0
    %2692 = vmatpush1.msra.mxu0 0.0
    %2693 = vmatprep.mubr.f32.mxu0 0.0
    %v2694 = vand.u32 %v111, 4294901760
    %2695 = vmatmul.mubr.f32.gmra.mrb[0].mxu0 %v2694
    %v2696 = vpop.f32.mrb[0].mxu0
    %v2697 = vadd.f32 %v2609, %v2696
    %v2698 = vpop.f32.mrb[0].mxu0
    %v2699 = vadd.f32 %v2611, %v2698
    %2700 = vdwg.mxu0
    %v2701 = vld [vmem:[#allocation2] sm:$0x3]
    %v2702 = vld [vmem:[%s3] sm:$0x1]
    %v2704 = vlaneseq
    %v2705 = vshrl.u32 %v2704, 7
    %v2706 = vsub.s32 0, %v2705
    %v2707 = vrot.slane %v2702, %v2706
    %2710 = vset.pattern.permute.xlu0 0
    %2711 = vperm.xlu0 %2710, %v2701
    %v2712 = vpop.permute.xlu0 %2711
    %v2714 = vmul.f32 %v2712, %v756
    %v2715 = vadd.f32 %v2707, %v2714
    %2716 = vset.pattern.permute.xlu0 1
    %2717 = vperm.xlu0 %2716, %v2701
    %v2718 = vpop.permute.xlu0 %2717
    %v2720 = vmul.f32 %v2718, %v758
    %v2721 = vadd.f32 %v2715, %v2720
    %2722 = vset.pattern.permute.xlu0 2
    %2723 = vperm.xlu0 %2722, %v2701
    %v2724 = vpop.permute.xlu0 %2723
    %v2726 = vmul.f32 %v2724, %v1403
    %v2727 = vadd.f32 %v2721, %v2726
    %2728 = vset.pattern.permute.xlu0 3
    %2729 = vperm.xlu0 %2728, %v2701
    %v2730 = vpop.permute.xlu0 %2729
    %v2732 = vmul.f32 %v2730, %v1405
    %v2733 = vadd.f32 %v2727, %v2732
    %2734 = vset.pattern.permute.xlu0 4
    %2735 = vperm.xlu0 %2734, %v2701
    %v2736 = vpop.permute.xlu0 %2735
    %v2738 = vmul.f32 %v2736, %v2050
    %v2739 = vadd.f32 %v2733, %v2738
    %2740 = vset.pattern.permute.xlu0 5
    %2741 = vperm.xlu0 %2740, %v2701
    %v2742 = vpop.permute.xlu0 %2741
    %v2744 = vmul.f32 %v2742, %v2052
    %v2745 = vadd.f32 %v2739, %v2744
    %2746 = vset.pattern.permute.xlu0 6
    %2747 = vperm.xlu0 %2746, %v2701
    %v2748 = vpop.permute.xlu0 %2747
    %v2750 = vmul.f32 %v2748, %v2697
    %v2751 = vadd.f32 %v2745, %v2750
    %2752 = vset.pattern.permute.xlu0 7
    %2753 = vperm.xlu0 %2752, %v2701
    %v2754 = vpop.permute.xlu0 %2753
    %v2756 = vmul.f32 %v2754, %v2699
    %v2757 = vadd.f32 %v2751, %v2756
    %v2758 = vtanh.pop %v2757
    %vm2759 = vcmask 254976
    %2760 = vst.msk [vmem:[#allocation7] sm:$0x3] %vm2759, %v2758
    // Predicated region
    $region26: #{tpu_custom_call.1} parent=1 // pred_check
      _
    $region27: #{tpu_custom_call.1} parent=1 // pred_check_branch
      %2762 = sbr.rel (0) target = $region29
    $region28: #{tpu_custom_call.1} parent=1 // pred_region
      %s2764 = ssub.s32 32, 32
      %2765 = vsyncadd [#allocation4], %s2764
      %s2767 = sshll.u32 [#allocation7], 4
      %s2768 = int_to_ptr.vmem [resolvable:$true] %s2767
      %2770 = dma.vmem_to_hbm [thread:$0]  %s2768, 32, %s4, [#allocation4]
    $region29: #{tpu_custom_call.1} parent=1 // pred_fallthru
      _
    // Predicated region
    $region30: #{tpu_custom_call.1} parent=1 // pred_check
      _
    $region31: #{tpu_custom_call.1} parent=1 // pred_check_branch
      %2772 = sbr.rel (0) target = $region33
    $region32: #{tpu_custom_call.1} parent=1 // pred_region
      %2773 = dma.done [#allocation4], 32
    $region33: #{tpu_custom_call.1} parent=1 // pred_fallthru
      _
    %2774 = vsyncpa [#allocation3], 1
    %2775 = vsyncpa [#allocation6], 1
    %2776 = vsyncpa [#allocation4], 1

</llo_original>
